<compile_context>
chip_gen: v7x
topology: tpu7x:2x2x1
jax: 0.10.0
libtpu: 0.0.40
codegen_flags: <defaults>
</compile_context>

<pallas_src>
import numpy as np
import jax
import jax.numpy as jnp
from jax import lax
from jax.experimental import pallas as pl
from jax.experimental.pallas import tpu as pltpu

H = 128       # LSTM hidden size (fixed by the module)
E = 300       # embedding dim (fixed by the module: LSTM input_size=300)
SEQ_IN = 500  # Linear(500, 1)


def bilstm_head_kernel(g_ref,      # [TT, 2B, 4H] bf16 gate pre-acts (x@Wih + b, [i,f,o,g], length-masked)
                       whh_ref,    # [2H, 4H]     bf16 [Whh_fwd ; Whh_bwd] stacked on axis 0, [i,f,o,g] cols
                       seqw_ref,   # [T_pad]      f32  SMEM: Linear(500,1) weight per (padded) timestep
                       bias_ref,   # [1, 2H]      f32  Linear bias (broadcast)
                       out_ref,    # [B, 2H]      f32
                       h_sc,       # [2B, H]      f32  carry: rows :B forward, rows B: backward
                       c_sc,       # [2B, H]      f32
                       acc_sc):    # [2B, H]      f32
    k = pl.program_id(0)
    nblk = pl.num_programs(0)
    TT, twoB, _ = g_ref.shape
    B = twoB // 2
    T_pad = seqw_ref.shape[0]
    f32 = jnp.float32

    @pl.when(k == 0)
    def _init():
        h_sc[...] = jnp.zeros_like(h_sc)
        c_sc[...] = jnp.zeros_like(c_sc)
        acc_sc[...] = jnp.zeros_like(acc_sc)

    # Hoisted once per grid block (not per timestep).
    whh = whh_ref[...]                                                # bf16 [2H, 4H]
    rows2 = lax.broadcasted_iota(jnp.int32, (twoB, 2 * H), 0)
    cols2 = lax.broadcasted_iota(jnp.int32, (twoB, 2 * H), 1)
    bdiag = ((rows2 < B) == (cols2 < H)).astype(f32)                  # block-diag selector [2B, 2H]
    rowv = lax.broadcasted_iota(jnp.int32, (twoB, 1), 0)
    topv = (rowv < B).astype(f32)                                     # 1 on forward rows
    botv = 1.0 - topv                                                 # 1 on backward rows
    t0 = k * TT

    def step(s, carry):
        h, c, acc = carry                                             # [2B, H] f32

        # Block-diagonal LHS [[h_f, 0], [0, h_b]] -> ONE wide bf16 MXU matmul
        # computing h_f@Whh_f (rows :B) and h_b@Whh_b (rows B:) together.
        # Mask-mul in f32 (no bf16 VALU on v5e), cast only for the MXU.
        hd = (jnp.concatenate([h, h], axis=1) * bdiag).astype(jnp.bfloat16)     # [2B, 2H]
        z = jnp.dot(hd, whh, preferred_element_type=f32)                        # [2B, 4H]
        gates = g_ref[s].astype(f32) + z

        # [i | f | o] in one sigmoid launch, g in one tanh launch.
        sg = jax.nn.sigmoid(gates[:, 0:3 * H])
        g = jnp.tanh(gates[:, 3 * H:4 * H])
        i = sg[:, 0:H]
        f = sg[:, H:2 * H]
        o = sg[:, 2 * H:3 * H]
        c = f * c + i * g
        h = o * jnp.tanh(c)               # == 0 past text_len (i/o gates pre-masked)

        # Linear(500,1) folded in: acc += seq_w[.] * h_t.  Head weights are SMEM
        # scalars (fwd rows: seqw[t]; bwd rows: seqw[T_pad-1-t]).
        t = t0 + s
        wf = seqw_ref[t]
        wb = seqw_ref[T_pad - 1 - t]
        wvec = topv * wf + botv * wb                                  # [2B, 1]
        acc = acc + wvec * h
        return h, c, acc

    h, c, acc = lax.fori_loop(
        0, TT, step, (h_sc[...], c_sc[...], acc_sc[...]), unroll=min(8, TT))

    h_sc[...] = h
    c_sc[...] = c
    acc_sc[...] = acc

    # Only the last grid step materializes the output block.
    @pl.when(k == nblk - 1)
    def _finalize():
        out_ref[...] = (jnp.concatenate([acc[0:B, :], acc[B:2 * B, :]], axis=1)
                        + bias_ref[...])


def model2_forward(params, data, *, time_block=None):
    tokens = data["text"]                      # [B, T] int32
    text_len = data["text_len"]                # [B]    int32
    emb = params["embedding"][tokens]          # [B, T, E]   (glue: embedding gather)
    B, T, _ = emb.shape
    f32, bf16 = jnp.float32, jnp.bfloat16

    # avg_sentence_ebd = mean(emb, 1) is computed by the torch module but never used -> skipped.

    # ---- time-block selection from a VMEM budget (double-buffered bf16 gate blocks) ----
    if time_block is not None:
        TT = max(1, int(time_block))
    else:
        per_step_bytes = 2 * B * 4 * H * 2          # bf16 gate bytes per timestep
        TT = int(max(1, min((24 * 2 ** 20) // (2 * per_step_bytes), 512, T)))
    nblk = -(-T // TT)
    T_pad = nblk * TT

    # Reorder PyTorch gate columns [i, f, g, o] -> [i, f, o, g] so the kernel
    # applies one wide sigmoid and one tanh.
    def reorder(w):
        return jnp.concatenate([w[..., :2 * H], w[..., 3 * H:4 * H], w[..., 2 * H:3 * H]],
                               axis=-1)

    # ---- hoisted input projection: one big bf16 GEMM over all timesteps ------
    wih = jnp.concatenate([reorder(params["wih_f"]), reorder(params["wih_b"])], axis=1)    # [E, 8H]
    b_all = jnp.concatenate([reorder(params["b_f"]), reorder(params["b_b"])], axis=1)      # [1, 8H]
    g_all = jnp.dot(emb.reshape(B * T, E).astype(bf16), wih.astype(bf16),
                    preferred_element_type=f32) + b_all                                    # [B*T, 8H] f32
    g_all = g_all.reshape(B, T, 8 * H)
    g_all = jnp.pad(g_all, ((0, 0), (0, T_pad - T), (0, 0)))                               # [B, T_pad, 8H]

    # pack_padded masking folded into gates: -1e9 on i/o gate columns for
    # t >= text_len forces h_t == 0 there (both directions), exactly matching
    # pad_packed_sequence's zero-filled outputs.  Column order is [i,f,o,g].
    NEG = jnp.float32(-1e9)
    pad_pos = jnp.arange(T_pad)[None, :] >= text_len[:, None]                              # [B, T_pad]
    col = jnp.arange(8 * H)
    cm = col % (4 * H)
    io_col = (cm < H) | ((cm >= 2 * H) & (cm < 3 * H))                                     # i and o cols
    g_all = g_all + jnp.where(pad_pos[:, :, None] & io_col[None, None, :], NEG, 0.0)
    g_all = g_all.astype(bf16)                                                             # bf16 HBM stream

    # Time-major; backward direction's gates pre-reversed so a single forward
    # loop advances both directions (fwd at t, bwd at T_pad-1-t).
    g_f = jnp.transpose(g_all[..., :4 * H], (1, 0, 2))                                     # [T_pad, B, 4H]
    g_b = jnp.transpose(g_all[..., 4 * H:], (1, 0, 2))                                     # [T_pad, B, 4H]
    g_comb = jnp.concatenate([g_f, g_b[::-1]], axis=1)                                     # [T_pad, 2B, 4H]

    # Recurrent weights stacked for the block-diagonal-LHS single matmul.
    whh_comb = jnp.concatenate([reorder(params["whh_f"]), reorder(params["whh_b"])],
                               axis=0).astype(bf16)                                        # [2H, 4H]

    # Linear(500,1) weight per (truncated / zero-padded) timestep, as an SMEM table.
    n_used = min(T, SEQ_IN)
    seqw_pad = jnp.zeros((T_pad,), f32).at[:n_used].set(params["seq_w"][:n_used])          # [T_pad]

    bias2 = jnp.broadcast_to(params["seq_b"].astype(f32), (1, 2 * H))                      # [1, 2H]

    # VMEM budget: double-buffered bf16 gate blocks + resident weights + scratch
    # + output, clamped below physical VMEM on every generation.
    gate_block_bytes = TT * 2 * B * 4 * H * 2
    whh_bytes = 2 * H * 4 * H * 2
    scratch_bytes = 3 * (2 * B * H * 4)
    out_bytes = B * 2 * H * 4
    vmem_limit = (2 * gate_block_bytes + 2 * whh_bytes + scratch_bytes
                  + 2 * out_bytes + 4 * 2 ** 20)
    vmem_limit = int(min(max(vmem_limit, 16 * 2 ** 20), 48 * 2 ** 20))

    out = pl.pallas_call(
        bilstm_head_kernel,
        out_shape=jax.ShapeDtypeStruct((B, 2 * H), jnp.float32),
        grid=(nblk,),
        in_specs=[
            pl.BlockSpec((TT, 2 * B, 4 * H), lambda k: (k, 0, 0)),          # streamed bf16 gate blocks
            pl.BlockSpec((2 * H, 4 * H), lambda k: (0, 0)),                 # resident recurrent weights
            pl.BlockSpec(memory_space=pltpu.MemorySpace.SMEM),              # head-weight scalar table
            pl.BlockSpec((1, 2 * H), lambda k: (0, 0)),                     # Linear bias
        ],
        out_specs=pl.BlockSpec((B, 2 * H), lambda k: (0, 0)),
        scratch_shapes=[pltpu.VMEM((2 * B, H), jnp.float32)] * 3,           # h / c / acc carries
        compiler_params=pltpu.CompilerParams(
            dimension_semantics=("arbitrary",),
            vmem_limit_bytes=vmem_limit,
        ),
    )(g_comb, whh_comb, seqw_pad, bias2)
    return out                                                              # [B, 2H]


# ---------------------------- pure-JAX reference (f32) -----------------------
def reference_forward(params, data):
    tokens, text_len = data["text"], data["text_len"]
    emb = params["embedding"][tokens].astype(jnp.float32)
    B, T, _ = emb.shape
    mask = (jnp.arange(T)[None, :] < text_len[:, None]).astype(jnp.float32)    # [B, T]

    def lstm_dir(wih, whh, b, time_order):
        def step(carry, t):
            h, c = carry
            x_t = emb[:, t, :]
            m = mask[:, t][:, None]
            gates = x_t @ wih + h @ whh + b
            i = jax.nn.sigmoid(gates[:, :H]); f = jax.nn.sigmoid(gates[:, H:2 * H])
            g = jnp.tanh(gates[:, 2 * H:3 * H]); o = jax.nn.sigmoid(gates[:, 3 * H:])
            c_new = f * c + i * g
            h_new = o * jnp.tanh(c_new)
            h = m * h_new + (1.0 - m) * h
            c = m * c_new + (1.0 - m) * c
            return (h, c), h * m
        init = (jnp.zeros((B, H)), jnp.zeros((B, H)))
        _, hs = lax.scan(step, init, time_order)                 # scanned order
        out = jnp.zeros((T, B, H)).at[time_order].set(hs)
        return jnp.transpose(out, (1, 0, 2))                     # [B, T, H]

    out_f = lstm_dir(params["wih_f"], params["whh_f"], params["b_f"][0], jnp.arange(T))
    out_b = lstm_dir(params["wih_b"], params["whh_b"], params["b_b"][0], jnp.arange(T)[::-1])
    rnn_out = jnp.concatenate([out_f, out_b], axis=-1)           # [B, T, 2H]
    ebd = jnp.transpose(rnn_out, (0, 2, 1))                      # [B, 2H, T]
    if T < SEQ_IN:
        ebd = jnp.pad(ebd, ((0, 0), (0, 0), (0, SEQ_IN - T)))
    else:
        ebd = ebd[:, :, :SEQ_IN]
    return ebd @ params["seq_w"] + params["seq_b"][0]


def init_params(key, vocab=50):
    ks = jax.random.split(key, 12)
    bl = 1.0 / np.sqrt(H)        # PyTorch LSTM default init bound
    bs = 1.0 / np.sqrt(SEQ_IN)   # PyTorch Linear default init bound
    u = lambda k, shape, b: jax.random.uniform(k, shape, jnp.float32, -b, b)
    return {
        "embedding": jax.random.normal(ks[0], (vocab, E), jnp.float32) * 0.1,
        "wih_f": u(ks[1], (E, 4 * H), bl),
        "whh_f": u(ks[2], (H, 4 * H), bl),
        "b_f":   u(ks[3], (1, 4 * H), bl) + u(ks[4], (1, 4 * H), bl),   # bias_ih + bias_hh
        "wih_b": u(ks[5], (E, 4 * H), bl),
        "whh_b": u(ks[6], (H, 4 * H), bl),
        "b_b":   u(ks[7], (1, 4 * H), bl) + u(ks[8], (1, 4 * H), bl),
        "seq_w": u(ks[9], (SEQ_IN,), bs),
        "seq_b": u(ks[10], (1,), bs),
    }


if __name__ == "__main__":
    key = jax.random.PRNGKey(0)
    pkey, tkey = jax.random.split(key)
    params = init_params(pkey)

    B, T, VOCAB = 2, 8, 50
    tokens = jax.random.randint(tkey, (B, T), 0, VOCAB, dtype=jnp.int32)
    text_len = jnp.array([8, 5], dtype=jnp.int32)
    data = {"text": tokens, "text_len": text_len}

    # time_block=4 -> 2 grid steps, exercising the streamed/carried-state path.
    out = model2_forward(params, data, time_block=4)
    out = jax.block_until_ready(out)

    ref = jax.block_until_ready(reference_forward(params, data))
    assert out.shape == (B, 2 * H), out.shape
    # bf16 matmul operands + bf16 gate streaming vs f32 reference -> relaxed
    # tolerance (tightening it would require f32 MXU / f32 gate storage).
    np.testing.assert_allclose(np.asarray(out), np.asarray(ref), rtol=1e-2, atol=1e-2)

    print("KERNEL_OK")
</pallas_src>

<mosaic_0001>
module attributes {stable_mosaic.version = 11 : i64} {
  func.func @bilstm_head_kernel(%arg0: i32, %arg1: memref<4x4x512xbf16, #tpu.memory_space<vmem>>, %arg2: memref<256x512xbf16, #tpu.memory_space<vmem>>, %arg3: memref<8xf32, #tpu.memory_space<smem>>, %arg4: memref<1x256xf32, #tpu.memory_space<vmem>>, %arg5: memref<2x256xf32, #tpu.memory_space<vmem>>, %arg6: memref<4x128xf32, #tpu.memory_space<vmem>>, %arg7: memref<4x128xf32, #tpu.memory_space<vmem>>, %arg8: memref<4x128xf32, #tpu.memory_space<vmem>>) attributes {dimension_semantics = [#tpu.dimension_semantics<arbitrary>], iteration_bounds = array<i64: 2>, scalar_prefetch = 0 : i64, scratch_operands = 3 : i64, tpu.core_type = #tpu.core_type<tc>, window_params = [{transform_indices = @transform_0, window_bounds = array<i64: 4, 4, 512>}, {pipeline_mode = #tpu.pipeline_mode<synchronous>, transform_indices = @transform_1, window_bounds = array<i64: 256, 512>}, {transform_indices = @transform_2, window_bounds = array<i64: 8>}, {pipeline_mode = #tpu.pipeline_mode<synchronous>, transform_indices = @transform_3, window_bounds = array<i64: 1, 256>}, {pipeline_mode = #tpu.pipeline_mode<synchronous>, transform_indices = @transform_4, window_bounds = array<i64: 2, 256>}]} {
    %c0_i32 = arith.constant 0 : i32
    %0 = arith.cmpi eq, %arg0, %c0_i32 : i32
    %1 = arith.extui %0 : i1 to i32
    %c0_i32_0 = arith.constant 0 : i32
    %2 = arith.cmpi ne, %1, %c0_i32_0 : i32
    scf.if %2 {
      %cst_40 = arith.constant 0.000000e+00 : f32
      %187 = vector.broadcast %cst_40 : f32 to vector<4x128xf32>
      %c0_41 = arith.constant 0 : index
      %c0_42 = arith.constant 0 : index
      %188 = vector.load %arg6[%c0_41, %c0_42] : memref<4x128xf32, #tpu.memory_space<vmem>>, vector<4x128xf32>
      tpu.vector_store %arg6[%c0_41, %c0_42], %187 {strides = array<i32>} : memref<4x128xf32, #tpu.memory_space<vmem>>, vector<4x128xf32>,
      %cst_43 = arith.constant 0.000000e+00 : f32
      %189 = vector.broadcast %cst_43 : f32 to vector<4x128xf32>
      %c0_44 = arith.constant 0 : index
      %c0_45 = arith.constant 0 : index
      %190 = vector.load %arg7[%c0_44, %c0_45] : memref<4x128xf32, #tpu.memory_space<vmem>>, vector<4x128xf32>
      tpu.vector_store %arg7[%c0_44, %c0_45], %189 {strides = array<i32>} : memref<4x128xf32, #tpu.memory_space<vmem>>, vector<4x128xf32>,
      %cst_46 = arith.constant 0.000000e+00 : f32
      %191 = vector.broadcast %cst_46 : f32 to vector<4x128xf32>
      %c0_47 = arith.constant 0 : index
      %c0_48 = arith.constant 0 : index
      %192 = vector.load %arg8[%c0_47, %c0_48] : memref<4x128xf32, #tpu.memory_space<vmem>>, vector<4x128xf32>
      tpu.vector_store %arg8[%c0_47, %c0_48], %191 {strides = array<i32>} : memref<4x128xf32, #tpu.memory_space<vmem>>, vector<4x128xf32>,
    } else {
    }
    %c0 = arith.constant 0 : index
    %c0_1 = arith.constant 0 : index
    %3 = vector.load %arg2[%c0, %c0_1] : memref<256x512xbf16, #tpu.memory_space<vmem>>, vector<256x512xbf16>
    %4 = tpu.iota {dimensions = array<i32: 0>} : vector<4x256xi32>
    %5 = tpu.iota {dimensions = array<i32: 1>} : vector<4x256xi32>
    %c2_i32 = arith.constant 2 : i32
    %6 = vector.broadcast %c2_i32 : i32 to vector<4x256xi32>
    %7 = arith.cmpi slt, %4, %6 : vector<4x256xi32>
    %c128_i32 = arith.constant 128 : i32
    %8 = vector.broadcast %c128_i32 : i32 to vector<4x256xi32>
    %9 = arith.cmpi slt, %5, %8 : vector<4x256xi32>
    %10 = arith.xori %7, %9 : vector<4x256xi1>
    %cst = arith.constant dense<true> : vector<4x256xi1>
    %11 = arith.xori %10, %cst : vector<4x256xi1>
    %12 = arith.extui %11 : vector<4x256xi1> to vector<4x256xi32>
    %13 = arith.sitofp %12 : vector<4x256xi32> to vector<4x256xf32>
    %14 = tpu.iota {dimensions = array<i32: 0>} : vector<4x1xi32>
    %c2_i32_2 = arith.constant 2 : i32
    %15 = vector.broadcast %c2_i32_2 : i32 to vector<4x1xi32>
    %16 = arith.cmpi slt, %14, %15 : vector<4x1xi32>
    %17 = arith.extui %16 : vector<4x1xi1> to vector<4x1xi32>
    %18 = arith.sitofp %17 : vector<4x1xi32> to vector<4x1xf32>
    %cst_3 = arith.constant 1.000000e+00 : f32
    %19 = vector.broadcast %cst_3 : f32 to vector<4x1xf32>
    %20 = arith.subf %19, %18 : vector<4x1xf32>
    %c4_i32 = arith.constant 4 : i32
    %21 = arith.muli %arg0, %c4_i32 : i32
    %c0_4 = arith.constant 0 : index
    %c0_5 = arith.constant 0 : index
    %22 = vector.load %arg6[%c0_4, %c0_5] : memref<4x128xf32, #tpu.memory_space<vmem>>, vector<4x128xf32>
    %c0_6 = arith.constant 0 : index
    %c0_7 = arith.constant 0 : index
    %23 = vector.load %arg7[%c0_6, %c0_7] : memref<4x128xf32, #tpu.memory_space<vmem>>, vector<4x128xf32>
    %c0_8 = arith.constant 0 : index
    %c0_9 = arith.constant 0 : index
    %24 = vector.load %arg8[%c0_8, %c0_9] : memref<4x128xf32, #tpu.memory_space<vmem>>, vector<4x128xf32>
    %c0_i32_10 = arith.constant 0 : i32
    %25 = tpu.concatenate %22, %22 in 1 : vector<4x128xf32>, vector<4x128xf32> -> vector<4x256xf32>
    %26 = arith.mulf %25, %13 : vector<4x256xf32>
    %27 = arith.truncf %26 : vector<4x256xf32> to vector<4x256xbf16>
    %cst_11 = arith.constant dense<0.000000e+00> : vector<4x512xf32>
    %28 = tpu.matmul %27, %3, %cst_11 {dimension_numbers = #tpu.dot_dimension_numbers<[1], [0], [0], [1], [0, 0, 1, 1], [], []>} : vector<4x256xbf16>, vector<256x512xbf16>, vector<4x512xf32> -> vector<4x512xf32>
    %29 = arith.index_cast %c0_i32_10 : i32 to index
    %c0_12 = arith.constant 0 : index
    %c0_13 = arith.constant 0 : index
    %30 = vector.load %arg1[%29, %c0_12, %c0_13] : memref<4x4x512xbf16, #tpu.memory_space<vmem>>, vector<1x4x512xbf16>
    %31 = vector.shape_cast %30 : vector<1x4x512xbf16> to vector<4x512xbf16>
    %32 = arith.extf %31 : vector<4x512xbf16> to vector<4x512xf32>
    %33 = arith.addf %32, %28 : vector<4x512xf32>
    %34 = vector.extract_strided_slice %33 {offsets = [0, 0], sizes = [4, 384], strides = [1, 1]} : vector<4x512xf32> to vector<4x384xf32>
    %35 = arith.negf %34 : vector<4x384xf32>
    %36 = math.exp %35 : vector<4x384xf32>
    %cst_14 = arith.constant 1.000000e+00 : f32
    %37 = vector.broadcast %cst_14 : f32 to vector<4x384xf32>
    %38 = arith.addf %37, %36 : vector<4x384xf32>
    %39 = arith.divf %37, %38 : vector<4x384xf32>
    %40 = vector.extract_strided_slice %33 {offsets = [0, 384], sizes = [4, 128], strides = [1, 1]} : vector<4x512xf32> to vector<4x128xf32>
    %41 = math.tanh %40 : vector<4x128xf32>
    %42 = vector.extract_strided_slice %39 {offsets = [0, 0], sizes = [4, 128], strides = [1, 1]} : vector<4x384xf32> to vector<4x128xf32>
    %43 = vector.extract_strided_slice %39 {offsets = [0, 128], sizes = [4, 128], strides = [1, 1]} : vector<4x384xf32> to vector<4x128xf32>
    %44 = vector.extract_strided_slice %39 {offsets = [0, 256], sizes = [4, 128], strides = [1, 1]} : vector<4x384xf32> to vector<4x128xf32>
    %45 = arith.mulf %43, %23 : vector<4x128xf32>
    %46 = arith.mulf %42, %41 : vector<4x128xf32>
    %47 = arith.addf %45, %46 : vector<4x128xf32>
    %48 = math.tanh %47 : vector<4x128xf32>
    %49 = arith.mulf %44, %48 : vector<4x128xf32>
    %50 = arith.addi %21, %c0_i32_10 : i32
    %51 = arith.index_cast %50 : i32 to index
    %52 = memref.load %arg3[%51] : memref<8xf32, #tpu.memory_space<smem>>
    %c7_i32 = arith.constant 7 : i32
    %53 = arith.subi %c7_i32, %50 : i32
    %54 = arith.index_cast %53 : i32 to index
    %55 = memref.load %arg3[%54] : memref<8xf32, #tpu.memory_space<smem>>
    %56 = vector.broadcast %52 : f32 to vector<4x1xf32>
    %57 = arith.mulf %18, %56 : vector<4x1xf32>
    %58 = vector.broadcast %55 : f32 to vector<4x1xf32>
    %59 = arith.mulf %20, %58 : vector<4x1xf32>
    %60 = arith.addf %57, %59 : vector<4x1xf32>
    %61 = vector.broadcast %60 : vector<4x1xf32> to vector<4x128xf32>
    %62 = arith.mulf %61, %49 : vector<4x128xf32>
    %63 = arith.addf %24, %62 : vector<4x128xf32>
    %c1_i32 = arith.constant 1 : i32
    %64 = tpu.concatenate %49, %49 in 1 : vector<4x128xf32>, vector<4x128xf32> -> vector<4x256xf32>
    %65 = arith.mulf %64, %13 : vector<4x256xf32>
    %66 = arith.truncf %65 : vector<4x256xf32> to vector<4x256xbf16>
    %cst_15 = arith.constant dense<0.000000e+00> : vector<4x512xf32>
    %67 = tpu.matmul %66, %3, %cst_15 {dimension_numbers = #tpu.dot_dimension_numbers<[1], [0], [0], [1], [0, 0, 1, 1], [], []>} : vector<4x256xbf16>, vector<256x512xbf16>, vector<4x512xf32> -> vector<4x512xf32>
    %68 = arith.index_cast %c1_i32 : i32 to index
    %c0_16 = arith.constant 0 : index
    %c0_17 = arith.constant 0 : index
    %69 = vector.load %arg1[%68, %c0_16, %c0_17] : memref<4x4x512xbf16, #tpu.memory_space<vmem>>, vector<1x4x512xbf16>
    %70 = vector.shape_cast %69 : vector<1x4x512xbf16> to vector<4x512xbf16>
    %71 = arith.extf %70 : vector<4x512xbf16> to vector<4x512xf32>
    %72 = arith.addf %71, %67 : vector<4x512xf32>
    %73 = vector.extract_strided_slice %72 {offsets = [0, 0], sizes = [4, 384], strides = [1, 1]} : vector<4x512xf32> to vector<4x384xf32>
    %74 = arith.negf %73 : vector<4x384xf32>
    %75 = math.exp %74 : vector<4x384xf32>
    %cst_18 = arith.constant 1.000000e+00 : f32
    %76 = vector.broadcast %cst_18 : f32 to vector<4x384xf32>
    %77 = arith.addf %76, %75 : vector<4x384xf32>
    %78 = arith.divf %76, %77 : vector<4x384xf32>
    %79 = vector.extract_strided_slice %72 {offsets = [0, 384], sizes = [4, 128], strides = [1, 1]} : vector<4x512xf32> to vector<4x128xf32>
    %80 = math.tanh %79 : vector<4x128xf32>
    %81 = vector.extract_strided_slice %78 {offsets = [0, 0], sizes = [4, 128], strides = [1, 1]} : vector<4x384xf32> to vector<4x128xf32>
    %82 = vector.extract_strided_slice %78 {offsets = [0, 128], sizes = [4, 128], strides = [1, 1]} : vector<4x384xf32> to vector<4x128xf32>
    %83 = vector.extract_strided_slice %78 {offsets = [0, 256], sizes = [4, 128], strides = [1, 1]} : vector<4x384xf32> to vector<4x128xf32>
    %84 = arith.mulf %82, %47 : vector<4x128xf32>
    %85 = arith.mulf %81, %80 : vector<4x128xf32>
    %86 = arith.addf %84, %85 : vector<4x128xf32>
    %87 = math.tanh %86 : vector<4x128xf32>
    %88 = arith.mulf %83, %87 : vector<4x128xf32>
    %89 = arith.addi %21, %c1_i32 : i32
    %90 = arith.index_cast %89 : i32 to index
    %91 = memref.load %arg3[%90] : memref<8xf32, #tpu.memory_space<smem>>
    %c7_i32_19 = arith.constant 7 : i32
    %92 = arith.subi %c7_i32_19, %89 : i32
    %93 = arith.index_cast %92 : i32 to index
    %94 = memref.load %arg3[%93] : memref<8xf32, #tpu.memory_space<smem>>
    %95 = vector.broadcast %91 : f32 to vector<4x1xf32>
    %96 = arith.mulf %18, %95 : vector<4x1xf32>
    %97 = vector.broadcast %94 : f32 to vector<4x1xf32>
    %98 = arith.mulf %20, %97 : vector<4x1xf32>
    %99 = arith.addf %96, %98 : vector<4x1xf32>
    %100 = vector.broadcast %99 : vector<4x1xf32> to vector<4x128xf32>
    %101 = arith.mulf %100, %88 : vector<4x128xf32>
    %102 = arith.addf %63, %101 : vector<4x128xf32>
    %c2_i32_20 = arith.constant 2 : i32
    %103 = tpu.concatenate %88, %88 in 1 : vector<4x128xf32>, vector<4x128xf32> -> vector<4x256xf32>
    %104 = arith.mulf %103, %13 : vector<4x256xf32>
    %105 = arith.truncf %104 : vector<4x256xf32> to vector<4x256xbf16>
    %cst_21 = arith.constant dense<0.000000e+00> : vector<4x512xf32>
    %106 = tpu.matmul %105, %3, %cst_21 {dimension_numbers = #tpu.dot_dimension_numbers<[1], [0], [0], [1], [0, 0, 1, 1], [], []>} : vector<4x256xbf16>, vector<256x512xbf16>, vector<4x512xf32> -> vector<4x512xf32>
    %107 = arith.index_cast %c2_i32_20 : i32 to index
    %c0_22 = arith.constant 0 : index
    %c0_23 = arith.constant 0 : index
    %108 = vector.load %arg1[%107, %c0_22, %c0_23] : memref<4x4x512xbf16, #tpu.memory_space<vmem>>, vector<1x4x512xbf16>
    %109 = vector.shape_cast %108 : vector<1x4x512xbf16> to vector<4x512xbf16>
    %110 = arith.extf %109 : vector<4x512xbf16> to vector<4x512xf32>
    %111 = arith.addf %110, %106 : vector<4x512xf32>
    %112 = vector.extract_strided_slice %111 {offsets = [0, 0], sizes = [4, 384], strides = [1, 1]} : vector<4x512xf32> to vector<4x384xf32>
    %113 = arith.negf %112 : vector<4x384xf32>
    %114 = math.exp %113 : vector<4x384xf32>
    %cst_24 = arith.constant 1.000000e+00 : f32
    %115 = vector.broadcast %cst_24 : f32 to vector<4x384xf32>
    %116 = arith.addf %115, %114 : vector<4x384xf32>
    %117 = arith.divf %115, %116 : vector<4x384xf32>
    %118 = vector.extract_strided_slice %111 {offsets = [0, 384], sizes = [4, 128], strides = [1, 1]} : vector<4x512xf32> to vector<4x128xf32>
    %119 = math.tanh %118 : vector<4x128xf32>
    %120 = vector.extract_strided_slice %117 {offsets = [0, 0], sizes = [4, 128], strides = [1, 1]} : vector<4x384xf32> to vector<4x128xf32>
    %121 = vector.extract_strided_slice %117 {offsets = [0, 128], sizes = [4, 128], strides = [1, 1]} : vector<4x384xf32> to vector<4x128xf32>
    %122 = vector.extract_strided_slice %117 {offsets = [0, 256], sizes = [4, 128], strides = [1, 1]} : vector<4x384xf32> to vector<4x128xf32>
    %123 = arith.mulf %121, %86 : vector<4x128xf32>
    %124 = arith.mulf %120, %119 : vector<4x128xf32>
    %125 = arith.addf %123, %124 : vector<4x128xf32>
    %126 = math.tanh %125 : vector<4x128xf32>
    %127 = arith.mulf %122, %126 : vector<4x128xf32>
    %128 = arith.addi %21, %c2_i32_20 : i32
    %129 = arith.index_cast %128 : i32 to index
    %130 = memref.load %arg3[%129] : memref<8xf32, #tpu.memory_space<smem>>
    %c7_i32_25 = arith.constant 7 : i32
    %131 = arith.subi %c7_i32_25, %128 : i32
    %132 = arith.index_cast %131 : i32 to index
    %133 = memref.load %arg3[%132] : memref<8xf32, #tpu.memory_space<smem>>
    %134 = vector.broadcast %130 : f32 to vector<4x1xf32>
    %135 = arith.mulf %18, %134 : vector<4x1xf32>
    %136 = vector.broadcast %133 : f32 to vector<4x1xf32>
    %137 = arith.mulf %20, %136 : vector<4x1xf32>
    %138 = arith.addf %135, %137 : vector<4x1xf32>
    %139 = vector.broadcast %138 : vector<4x1xf32> to vector<4x128xf32>
    %140 = arith.mulf %139, %127 : vector<4x128xf32>
    %141 = arith.addf %102, %140 : vector<4x128xf32>
    %c3_i32 = arith.constant 3 : i32
    %142 = tpu.concatenate %127, %127 in 1 : vector<4x128xf32>, vector<4x128xf32> -> vector<4x256xf32>
    %143 = arith.mulf %142, %13 : vector<4x256xf32>
    %144 = arith.truncf %143 : vector<4x256xf32> to vector<4x256xbf16>
    %cst_26 = arith.constant dense<0.000000e+00> : vector<4x512xf32>
    %145 = tpu.matmul %144, %3, %cst_26 {dimension_numbers = #tpu.dot_dimension_numbers<[1], [0], [0], [1], [0, 0, 1, 1], [], []>} : vector<4x256xbf16>, vector<256x512xbf16>, vector<4x512xf32> -> vector<4x512xf32>
    %146 = arith.index_cast %c3_i32 : i32 to index
    %c0_27 = arith.constant 0 : index
    %c0_28 = arith.constant 0 : index
    %147 = vector.load %arg1[%146, %c0_27, %c0_28] : memref<4x4x512xbf16, #tpu.memory_space<vmem>>, vector<1x4x512xbf16>
    %148 = vector.shape_cast %147 : vector<1x4x512xbf16> to vector<4x512xbf16>
    %149 = arith.extf %148 : vector<4x512xbf16> to vector<4x512xf32>
    %150 = arith.addf %149, %145 : vector<4x512xf32>
    %151 = vector.extract_strided_slice %150 {offsets = [0, 0], sizes = [4, 384], strides = [1, 1]} : vector<4x512xf32> to vector<4x384xf32>
    %152 = arith.negf %151 : vector<4x384xf32>
    %153 = math.exp %152 : vector<4x384xf32>
    %cst_29 = arith.constant 1.000000e+00 : f32
    %154 = vector.broadcast %cst_29 : f32 to vector<4x384xf32>
    %155 = arith.addf %154, %153 : vector<4x384xf32>
    %156 = arith.divf %154, %155 : vector<4x384xf32>
    %157 = vector.extract_strided_slice %150 {offsets = [0, 384], sizes = [4, 128], strides = [1, 1]} : vector<4x512xf32> to vector<4x128xf32>
    %158 = math.tanh %157 : vector<4x128xf32>
    %159 = vector.extract_strided_slice %156 {offsets = [0, 0], sizes = [4, 128], strides = [1, 1]} : vector<4x384xf32> to vector<4x128xf32>
    %160 = vector.extract_strided_slice %156 {offsets = [0, 128], sizes = [4, 128], strides = [1, 1]} : vector<4x384xf32> to vector<4x128xf32>
    %161 = vector.extract_strided_slice %156 {offsets = [0, 256], sizes = [4, 128], strides = [1, 1]} : vector<4x384xf32> to vector<4x128xf32>
    %162 = arith.mulf %160, %125 : vector<4x128xf32>
    %163 = arith.mulf %159, %158 : vector<4x128xf32>
    %164 = arith.addf %162, %163 : vector<4x128xf32>
    %165 = math.tanh %164 : vector<4x128xf32>
    %166 = arith.mulf %161, %165 : vector<4x128xf32>
    %167 = arith.addi %21, %c3_i32 : i32
    %168 = arith.index_cast %167 : i32 to index
    %169 = memref.load %arg3[%168] : memref<8xf32, #tpu.memory_space<smem>>
    %c7_i32_30 = arith.constant 7 : i32
    %170 = arith.subi %c7_i32_30, %167 : i32
    %171 = arith.index_cast %170 : i32 to index
    %172 = memref.load %arg3[%171] : memref<8xf32, #tpu.memory_space<smem>>
    %173 = vector.broadcast %169 : f32 to vector<4x1xf32>
    %174 = arith.mulf %18, %173 : vector<4x1xf32>
    %175 = vector.broadcast %172 : f32 to vector<4x1xf32>
    %176 = arith.mulf %20, %175 : vector<4x1xf32>
    %177 = arith.addf %174, %176 : vector<4x1xf32>
    %178 = vector.broadcast %177 : vector<4x1xf32> to vector<4x128xf32>
    %179 = arith.mulf %178, %166 : vector<4x128xf32>
    %180 = arith.addf %141, %179 : vector<4x128xf32>
    %c4_i32_31 = arith.constant 4 : i32
    %c0_32 = arith.constant 0 : index
    %c0_33 = arith.constant 0 : index
    %181 = vector.load %arg6[%c0_32, %c0_33] : memref<4x128xf32, #tpu.memory_space<vmem>>, vector<4x128xf32>
    tpu.vector_store %arg6[%c0_32, %c0_33], %166 {strides = array<i32>} : memref<4x128xf32, #tpu.memory_space<vmem>>, vector<4x128xf32>,
    %c0_34 = arith.constant 0 : index
    %c0_35 = arith.constant 0 : index
    %182 = vector.load %arg7[%c0_34, %c0_35] : memref<4x128xf32, #tpu.memory_space<vmem>>, vector<4x128xf32>
    tpu.vector_store %arg7[%c0_34, %c0_35], %164 {strides = array<i32>} : memref<4x128xf32, #tpu.memory_space<vmem>>, vector<4x128xf32>,
    %c0_36 = arith.constant 0 : index
    %c0_37 = arith.constant 0 : index
    %183 = vector.load %arg8[%c0_36, %c0_37] : memref<4x128xf32, #tpu.memory_space<vmem>>, vector<4x128xf32>
    tpu.vector_store %arg8[%c0_36, %c0_37], %180 {strides = array<i32>} : memref<4x128xf32, #tpu.memory_space<vmem>>, vector<4x128xf32>,
    %c1_i32_38 = arith.constant 1 : i32
    %184 = arith.cmpi eq, %arg0, %c1_i32_38 : i32
    %185 = arith.extui %184 : i1 to i32
    %c0_i32_39 = arith.constant 0 : i32
    %186 = arith.cmpi ne, %185, %c0_i32_39 : i32
    scf.if %186 {
      %187 = vector.extract_strided_slice %180 {offsets = [0, 0], sizes = [2, 128], strides = [1, 1]} : vector<4x128xf32> to vector<2x128xf32>
      %188 = vector.extract_strided_slice %180 {offsets = [2, 0], sizes = [2, 128], strides = [1, 1]} : vector<4x128xf32> to vector<2x128xf32>
      %189 = tpu.concatenate %187, %188 in 1 : vector<2x128xf32>, vector<2x128xf32> -> vector<2x256xf32>
      %c0_40 = arith.constant 0 : index
      %c0_41 = arith.constant 0 : index
      %190 = vector.load %arg4[%c0_40, %c0_41] : memref<1x256xf32, #tpu.memory_space<vmem>>, vector<1x256xf32>
      %191 = vector.broadcast %190 : vector<1x256xf32> to vector<2x256xf32>
      %192 = arith.addf %189, %191 : vector<2x256xf32>
      %c0_42 = arith.constant 0 : index
      %c0_43 = arith.constant 0 : index
      %193 = vector.load %arg5[%c0_42, %c0_43] : memref<2x256xf32, #tpu.memory_space<vmem>>, vector<2x256xf32>
      tpu.vector_store %arg5[%c0_42, %c0_43], %192 {strides = array<i32>} : memref<2x256xf32, #tpu.memory_space<vmem>>, vector<2x256xf32>,
    } else {
    }
    return
  }
  func.func @transform_0(%arg0: i32) -> (i32, i32, i32) {
    %c0_i32 = arith.constant 0 : i32
    %c0_i32_0 = arith.constant 0 : i32
    %c0_i32_1 = arith.constant 0 : i32
    return %arg0, %c0_i32, %c0_i32_0 : i32, i32, i32
  }
  func.func @transform_1(%arg0: i32) -> (i32, i32) {
    %c0_i32 = arith.constant 0 : i32
    %c0_i32_0 = arith.constant 0 : i32
    %c0_i32_1 = arith.constant 0 : i32
    return %c0_i32, %c0_i32_0 : i32, i32
  }
  func.func @transform_2(%arg0: i32) -> i32 {
    %c0_i32 = arith.constant 0 : i32
    %c0_i32_0 = arith.constant 0 : i32
    return %c0_i32 : i32
  }
  func.func @transform_3(%arg0: i32) -> (i32, i32) {
    %c0_i32 = arith.constant 0 : i32
    %c0_i32_0 = arith.constant 0 : i32
    %c0_i32_1 = arith.constant 0 : i32
    return %c0_i32, %c0_i32_0 : i32, i32
  }
  func.func @transform_4(%arg0: i32) -> (i32, i32) {
    %c0_i32 = arith.constant 0 : i32
    %c0_i32_0 = arith.constant 0 : i32
    %c0_i32_1 = arith.constant 0 : i32
    return %c0_i32, %c0_i32_0 : i32, i32
  }
}

</mosaic_0001>

<llo_original>
// kernel: tpu_custom_call.1
$region0: #{tpu_custom_call.1}
  #allocation0 [shape = 'u32[]', space=smem, size = 0x4, offset = 0x4, fixed_abs, tag = 'smem constant byte address 0x4 - core index']
  #allocation1 [shape = 'u32[144,128]{1,0:T(1,128)}', space=vmem, size = 0x12000, scoped, tag = 'internal scratch']
  #allocation2 [shape = 'f32[4,128]{1,0:T(4,128)}', space=vmem, size = 0x800, scoped, tag = 'scratch operand']
  #allocation3 [shape = 'f32[4,128]{1,0:T(4,128)}', space=vmem, size = 0x800, scoped, tag = 'scratch operand']
  #allocation4 [shape = 'f32[4,128]{1,0:T(4,128)}', space=vmem, size = 0x800, scoped, tag = 'scratch operand']
  %s0 = inlined_call_operand.hbm [shape: bf16[8,4,512], index: 0, kind: input, shape index: {}]
  %s1 = inlined_call_operand.hbm [shape: bf16[256,512], index: 1, kind: input, shape index: {}]
  %s2 = inlined_call_operand.vmem [shape: f32[8], index: 2, kind: input, shape index: {}]
  %s3 = inlined_call_operand.vmem [shape: f32[1,256], index: 3, kind: input, shape index: {}]
  %s4 = inlined_call_operand.hbm [shape: f32[2,256], index: 4, kind: output, shape index: {}]
  %s5 = sld [smem:[#allocation0]]
  $region69: #{tpu_custom_call.1} parent=0
    _
  %s7 = ssub.s32 1, %s5
  %s8 = scalar_select 0, %s7, %s5
  $region1: #{tpu_custom_call.1} parent=0
    #allocation5 [shape = 'u8[32768]{0}', space=vmem, size = 0x8000, scoped, tag = 'input window, operand 0']
    #allocation6 [shape = 's32[2]{0}', space=sflag, size = 0x8, scoped, tag = 'scoped memory for tpu_custom_call.1']
    #allocation7 [shape = 's32[2]{0}', space=sflag, size = 0x8, scoped, tag = 'scoped memory for tpu_custom_call.1']
    #allocation8 [shape = 's32[2]{0}', space=sflag, size = 0x8, scoped, tag = 'scoped memory for tpu_custom_call.1']
    #allocation9 [shape = 'u8[262144]{0}', space=vmem, size = 0x40000, scoped, tag = 'input window, operand 1, single buffered']
    #allocation10 [shape = 's32[1]{0}', space=sflag, size = 0x4, scoped, tag = 'scoped memory for tpu_custom_call.1']
    #allocation11 [shape = 'u8[512]{0}', space=smem, size = 0x200, scoped, tag = 'input window, operand 2, single buffered']
    #allocation12 [shape = 'u8[2048]{0}', space=vmem, size = 0x800, scoped, tag = 'output window, operand 0, single buffered']
    %9 = vsyncpa [#allocation6], 0
    %s10 = scalar_lea.sflag [#allocation6], 1
    %11 = vsyncpa %s10, 0
    %12 = vsyncpa [#allocation10], 0
    %13 = vsyncpa [#allocation8], 0
    %14 = vsyncpa [#allocation7], 0
    loop: start=0, step=1, limit=4
    $region2: #{tpu_custom_call.1} parent=1 // loop_pre_header
      _
    $region3: #{tpu_custom_call.1} parent=1 // loop_header
      %s16 = sphi 0, %s20
      %p17 = scmp.ge.s32.totalorder %s16, 4
      %s26 = sphi 0, %s28
      %s29 = sphi 0, %s26
      %s30 = sphi 0, %s29
      %s46 = sphi 0, %s30
      %s50 = sphi 0, %s50
      %s52 = sphi 0, %s50
      %s53 = sphi 0, %s52
      %s67 = sphi 0, %s53
      %s71 = sphi 0, %s71
      %s73 = sphi 0, %s71
      %s74 = sphi 0, %s73
      %s88 = sphi 0, %s74
      %s92 = sphi 0, %s92
      %s94 = sphi 0, %s92
      %s95 = sphi 0, %s94
      %s109 = sphi 0, %s95
      %s113 = sphi 0, %s113
      %s115 = sphi 0, %s113
      %s116 = sphi 0, %s115
      %s130 = sphi 0, %s116
    $region4: #{tpu_custom_call.1} parent=1 // loop_header_branch
      %19 = sbr.rel (%p17) target = $region8
    $region5: #{tpu_custom_call.1} parent=1 // loop_body
      %s21 = ssub.s32 %s16, 1
      %s22 = ssub.s32 %s16, 2
      %s23 = sadd.s32 %s16, 1
      %s24 = ssub.s32 %s16, %s23
      %p25 = scmp.eq.s32.totalorder %s24, 0
      %s27 = sadd.s32 %s26, 1
      %s28 = scalar_select %p25, %s26, %s27
      %p31 = pneg %p25
      %p32 = scmp.eq.s32.totalorder %s16, 1
      %p33 = por %p31, %p32
      %p34 = scmp.ne.s32.totalorder %s26, %s29
      %p35 = scmp.eq.s32.totalorder %s16, 0
      %p36 = por %p34, %p35
      %p37 = scmp.ne.s32.totalorder %s26, %s29
      %p38 = scmp.eq.s32.totalorder %s21, 1
      %p39 = por %p37, %p38
      %p40 = scmp.ne.s32.totalorder %s29, %s30
      %p41 = scmp.eq.s32.totalorder %s21, 0
      %p42 = por %p40, %p41
      %p43 = scmp.ne.s32.totalorder %s29, %s30
      %p44 = scmp.eq.s32.totalorder %s22, 1
      %p45 = por %p43, %p44
      %p47 = scmp.ne.s32.totalorder %s30, %s46
      %p48 = scmp.eq.s32.totalorder %s22, 0
      %p49 = por %p47, %p48
      %s51 = sadd.s32 %s50, 1
      %p54 = scmp.eq.s32.totalorder %s16, 1
      %p55 = scmp.ne.s32.totalorder %s50, %s52
      %p56 = scmp.eq.s32.totalorder %s16, 0
      %p57 = por %p55, %p56
      %p58 = scmp.ne.s32.totalorder %s50, %s52
      %p59 = scmp.eq.s32.totalorder %s21, 1
      %p60 = por %p58, %p59
      %p61 = scmp.ne.s32.totalorder %s52, %s53
      %p62 = scmp.eq.s32.totalorder %s21, 0
      %p63 = por %p61, %p62
      %p64 = scmp.ne.s32.totalorder %s52, %s53
      %p65 = scmp.eq.s32.totalorder %s22, 1
      %p66 = por %p64, %p65
      %p68 = scmp.ne.s32.totalorder %s53, %s67
      %p69 = scmp.eq.s32.totalorder %s22, 0
      %p70 = por %p68, %p69
      %s72 = sadd.s32 %s71, 1
      %p75 = scmp.eq.s32.totalorder %s16, 1
      %p76 = scmp.ne.s32.totalorder %s71, %s73
      %p77 = scmp.eq.s32.totalorder %s16, 0
      %p78 = por %p76, %p77
      %p79 = scmp.ne.s32.totalorder %s71, %s73
      %p80 = scmp.eq.s32.totalorder %s21, 1
      %p81 = por %p79, %p80
      %p82 = scmp.ne.s32.totalorder %s73, %s74
      %p83 = scmp.eq.s32.totalorder %s21, 0
      %p84 = por %p82, %p83
      %p85 = scmp.ne.s32.totalorder %s73, %s74
      %p86 = scmp.eq.s32.totalorder %s22, 1
      %p87 = por %p85, %p86
      %p89 = scmp.ne.s32.totalorder %s74, %s88
      %p90 = scmp.eq.s32.totalorder %s22, 0
      %p91 = por %p89, %p90
      %s93 = sadd.s32 %s92, 1
      %p96 = scmp.eq.s32.totalorder %s16, 1
      %p97 = scmp.ne.s32.totalorder %s92, %s94
      %p98 = scmp.eq.s32.totalorder %s16, 0
      %p99 = por %p97, %p98
      %p100 = scmp.ne.s32.totalorder %s92, %s94
      %p101 = scmp.eq.s32.totalorder %s21, 1
      %p102 = por %p100, %p101
      %p103 = scmp.ne.s32.totalorder %s94, %s95
      %p104 = scmp.eq.s32.totalorder %s21, 0
      %p105 = por %p103, %p104
      %p106 = scmp.ne.s32.totalorder %s94, %s95
      %p107 = scmp.eq.s32.totalorder %s22, 1
      %p108 = por %p106, %p107
      %p110 = scmp.ne.s32.totalorder %s95, %s109
      %p111 = scmp.eq.s32.totalorder %s22, 0
      %p112 = por %p110, %p111
      %s114 = sadd.s32 %s113, 1
      %p117 = scmp.eq.s32.totalorder %s16, 1
      %p118 = scmp.ne.s32.totalorder %s113, %s115
      %p119 = scmp.eq.s32.totalorder %s16, 0
      %p120 = por %p118, %p119
      %p121 = scmp.ne.s32.totalorder %s113, %s115
      %p122 = scmp.eq.s32.totalorder %s21, 1
      %p123 = por %p121, %p122
      %p124 = scmp.ne.s32.totalorder %s115, %s116
      %p125 = scmp.eq.s32.totalorder %s21, 0
      %p126 = por %p124, %p125
      %p127 = scmp.ne.s32.totalorder %s115, %s116
      %p128 = scmp.eq.s32.totalorder %s22, 1
      %p129 = por %p127, %p128
      %p131 = scmp.ne.s32.totalorder %s116, %s130
      %p132 = scmp.eq.s32.totalorder %s22, 0
      %p133 = por %p131, %p132
      %p134 = scmp.le.s32.totalorder 1, %s16
      %p135 = scmp.lt.s32.totalorder %s16, 3
      %p136 = pnand %p134, %p135
      %p137 = pneg %p136
      // Predicated region
      $region9: #{tpu_custom_call.1} parent=5 // pred_check
        _
      $region10: #{tpu_custom_call.1} parent=5 // pred_check_branch
        %139 = sbr.rel (%p136) target = $region12
      $region11: #{tpu_custom_call.1} parent=5 // pred_region
        %s140 = ssub.s32 %s16, 1
        // Predicated region
        $region13: #{tpu_custom_call.1} parent=11 // pred_check
          %p141 = pneg %p63
        $region14: #{tpu_custom_call.1} parent=11 // pred_check_branch
          %143 = sbr.rel (%p141) target = $region16
        $region15: #{tpu_custom_call.1} parent=11 // pred_region
          %s145 = ssub.s32 8192, 8192
          %146 = vsyncadd [#allocation10], %s145
          %s147 = sshll.u32 [#allocation9], 4
          %s148 = int_to_ptr.vmem [resolvable:$true] %s147
          %153 = dma.hbm_to_vmem [thread:$0]  %s1, 8192, %s148, [#allocation10], 256, 256, 16
        $region16: #{tpu_custom_call.1} parent=11 // pred_fallthru
          _
        // Predicated region
        $region17: #{tpu_custom_call.1} parent=11 // pred_check
          %p154 = pneg %p84
        $region18: #{tpu_custom_call.1} parent=11 // pred_check_branch
          %156 = sbr.rel (%p154) target = $region20
        $region19: #{tpu_custom_call.1} parent=11 // pred_region
          %s158 = ssub.s32 16, 16
          %159 = vsyncadd [#allocation8], %s158
          %s161 = sshll.u32 %s2, 4
          %s162 = int_to_ptr.vmem [resolvable:$true] %s161
          %164 = dma.vmem_to_smem %s162, 16, [#allocation11], [#allocation8]
        $region20: #{tpu_custom_call.1} parent=11 // pred_fallthru
          _
        // Predicated region
        $region21: #{tpu_custom_call.1} parent=11 // pred_check
          %p165 = pneg %p105
        $region22: #{tpu_custom_call.1} parent=11 // pred_check_branch
          %167 = sbr.rel (%p165) target = $region24
        $region23: #{tpu_custom_call.1} parent=11 // pred_region
          _
        $region24: #{tpu_custom_call.1} parent=11 // pred_fallthru
          _
      $region12: #{tpu_custom_call.1} parent=5 // pred_fallthru
        _
      %p168 = scmp.lt.s32.totalorder %s16, 2
      // Predicated region
      $region25: #{tpu_custom_call.1} parent=5 // pred_check
        %p169 = pneg %p168
      $region26: #{tpu_custom_call.1} parent=5 // pred_check_branch
        %171 = sbr.rel (%p169) target = $region28
      $region27: #{tpu_custom_call.1} parent=5 // pred_region
        // Predicated region
        $region29: #{tpu_custom_call.1} parent=27 // pred_check
          %p172 = pneg %p36
        $region30: #{tpu_custom_call.1} parent=27 // pred_check_branch
          %174 = sbr.rel (%p172) target = $region32
        $region31: #{tpu_custom_call.1} parent=27 // pred_region
          %s175 = sand.u32 %s26, 1
          %s176 = scalar_lea.sflag [#allocation6], %s175
          %s177 = sand.u32 %s26, 1
          %s178 = smul.addr %s177, 32
          %s179 = scalar_lea.vmem [#allocation5], %s178
          %s180 = smul.u32 4, %s16
          %s182 = ssub.s32 512, 512
          %183 = vsyncadd %s176, %s182
          %s184 = smul.addr %s180, 4
          %s185 = smul.addr %s184, 32
          %s186 = scalar_lea.hbm %s0, %s185
          %s187 = sshll.u32 %s179, 4
          %s188 = int_to_ptr.vmem [resolvable:$true] %s187
          %193 = dma.hbm_to_vmem [thread:$0]  %s186, 512, %s188, %s176, 128, 128, 8
        $region32: #{tpu_custom_call.1} parent=27 // pred_fallthru
          _
      $region28: #{tpu_custom_call.1} parent=5 // pred_fallthru
        _
      %p194 = scmp.le.s32.totalorder 1, %s16
      %p195 = scmp.lt.s32.totalorder %s16, 3
      %p196 = pnand %p194, %p195
      %p197 = pneg %p196
      // Predicated region
      $region33: #{tpu_custom_call.1} parent=5 // pred_check
        _
      $region34: #{tpu_custom_call.1} parent=5 // pred_check_branch
        %199 = sbr.rel (%p196) target = $region36
      $region35: #{tpu_custom_call.1} parent=5 // pred_region
        %s200 = ssub.s32 %s16, 1
        %s201 = sand.u32 %s29, 1
        %s202 = scalar_lea.sflag [#allocation6], %s201
        %s203 = sand.u32 %s29, 1
        %s204 = smul.addr %s203, 32
        %s205 = scalar_lea.vmem [#allocation5], %s204
        // Predicated region
        $region37: #{tpu_custom_call.1} parent=35 // pred_check
          %p206 = pneg %p42
        $region38: #{tpu_custom_call.1} parent=35 // pred_check_branch
          %208 = sbr.rel (%p206) target = $region40
        $region39: #{tpu_custom_call.1} parent=35 // pred_region
          %209 = dma.done %s202, 512
        $region40: #{tpu_custom_call.1} parent=35 // pred_fallthru
          _
        // Predicated region
        $region41: #{tpu_custom_call.1} parent=35 // pred_check
          %p210 = pneg %p63
        $region42: #{tpu_custom_call.1} parent=35 // pred_check_branch
          %212 = sbr.rel (%p210) target = $region44
        $region43: #{tpu_custom_call.1} parent=35 // pred_region
          %213 = dma.done [#allocation10], 8192
        $region44: #{tpu_custom_call.1} parent=35 // pred_fallthru
          _
        // Predicated region
        $region45: #{tpu_custom_call.1} parent=35 // pred_check
          %p214 = pneg %p84
        $region46: #{tpu_custom_call.1} parent=35 // pred_check_branch
          %216 = sbr.rel (%p214) target = $region48
        $region47: #{tpu_custom_call.1} parent=35 // pred_region
          %217 = dma.done [#allocation8], 16
        $region48: #{tpu_custom_call.1} parent=35 // pred_fallthru
          _
        %218 = sfence
        %s219 = sand.u32 %s29, 1
        %s220 = scalar_lea.sflag [#allocation6], %s219
        %s221 = sand.u32 %s29, 1
        %s222 = smul.addr %s221, 32
        %s223 = scalar_lea.vmem [#allocation5], %s222
        %p224 = pneg %p42
        %p225 = pneg %p39
        %p226 = pneg %p63
        %p227 = pneg %p60
        %p228 = pneg %p84
        %p229 = pneg %p81
        %p230 = pneg %p105
        %p231 = pneg %p102
        %p232 = pneg %p126
        %p233 = pneg %p123
        %s234 = smul.u32 4, %s21
        %p235 = scmp.eq.s32.totalorder %s21, 0
        // Predicated region
        $region49: #{tpu_custom_call.1} parent=35 // pred_check
          %p236 = pneg %p235
        $region50: #{tpu_custom_call.1} parent=35 // pred_check_branch
          %238 = sbr.rel (%p236) target = $region52
        $region51: #{tpu_custom_call.1} parent=35 // pred_region
          %239 = vst [vmem:[#allocation2] sm:$0xf] 0.0
          %240 = vst [vmem:[#allocation3] sm:$0xf] 0.0
          %241 = vst [vmem:[#allocation4] sm:$0xf] 0.0
        $region52: #{tpu_custom_call.1} parent=35 // pred_fallthru
          _
        %v242 = vld [vmem:[#allocation9] sm:$0xff]
        %v243 = vld [vmem:[#allocation9 + $0x8] sm:$0xff]
        %v244 = vld [vmem:[#allocation9 + $0x10] sm:$0xff]
        %v245 = vld [vmem:[#allocation9 + $0x18] sm:$0xff]
        %v246 = vld [vmem:[#allocation9 + $0x20] sm:$0xff]
        %v247 = vld [vmem:[#allocation9 + $0x28] sm:$0xff]
        %v248 = vld [vmem:[#allocation9 + $0x30] sm:$0xff]
        %v249 = vld [vmem:[#allocation9 + $0x38] sm:$0xff]
        %v250 = vld [vmem:[#allocation9 + $0x40] sm:$0xff]
        %v251 = vld [vmem:[#allocation9 + $0x48] sm:$0xff]
        %v252 = vld [vmem:[#allocation9 + $0x50] sm:$0xff]
        %v253 = vld [vmem:[#allocation9 + $0x58] sm:$0xff]
        %v254 = vld [vmem:[#allocation9 + $0x60] sm:$0xff]
        %v255 = vld [vmem:[#allocation9 + $0x68] sm:$0xff]
        %v256 = vld [vmem:[#allocation9 + $0x70] sm:$0xff]
        %v257 = vld [vmem:[#allocation9 + $0x78] sm:$0xff]
        %v258 = vld [vmem:[#allocation9 + $0x80] sm:$0xff]
        %v259 = vld [vmem:[#allocation9 + $0x88] sm:$0xff]
        %v260 = vld [vmem:[#allocation9 + $0x90] sm:$0xff]
        %v261 = vld [vmem:[#allocation9 + $0x98] sm:$0xff]
        %v262 = vld [vmem:[#allocation9 + $0xa0] sm:$0xff]
        %v263 = vld [vmem:[#allocation9 + $0xa8] sm:$0xff]
        %v264 = vld [vmem:[#allocation9 + $0xb0] sm:$0xff]
        %v265 = vld [vmem:[#allocation9 + $0xb8] sm:$0xff]
        %v266 = vld [vmem:[#allocation9 + $0xc0] sm:$0xff]
        %v267 = vld [vmem:[#allocation9 + $0xc8] sm:$0xff]
        %v268 = vld [vmem:[#allocation9 + $0xd0] sm:$0xff]
        %v269 = vld [vmem:[#allocation9 + $0xd8] sm:$0xff]
        %v270 = vld [vmem:[#allocation9 + $0xe0] sm:$0xff]
        %v271 = vld [vmem:[#allocation9 + $0xe8] sm:$0xff]
        %v272 = vld [vmem:[#allocation9 + $0xf0] sm:$0xff]
        %v273 = vld [vmem:[#allocation9 + $0xf8] sm:$0xff]
        %v274 = vld [vmem:[#allocation9 + $0x100] sm:$0xff]
        %v275 = vld [vmem:[#allocation9 + $0x108] sm:$0xff]
        %v276 = vld [vmem:[#allocation9 + $0x110] sm:$0xff]
        %v277 = vld [vmem:[#allocation9 + $0x118] sm:$0xff]
        %v278 = vld [vmem:[#allocation9 + $0x120] sm:$0xff]
        %v279 = vld [vmem:[#allocation9 + $0x128] sm:$0xff]
        %v280 = vld [vmem:[#allocation9 + $0x130] sm:$0xff]
        %v281 = vld [vmem:[#allocation9 + $0x138] sm:$0xff]
        %v282 = vld [vmem:[#allocation9 + $0x140] sm:$0xff]
        %v283 = vld [vmem:[#allocation9 + $0x148] sm:$0xff]
        %v284 = vld [vmem:[#allocation9 + $0x150] sm:$0xff]
        %v285 = vld [vmem:[#allocation9 + $0x158] sm:$0xff]
        %v286 = vld [vmem:[#allocation9 + $0x160] sm:$0xff]
        %v287 = vld [vmem:[#allocation9 + $0x168] sm:$0xff]
        %v288 = vld [vmem:[#allocation9 + $0x170] sm:$0xff]
        %v289 = vld [vmem:[#allocation9 + $0x178] sm:$0xff]
        %v290 = vld [vmem:[#allocation9 + $0x180] sm:$0xff]
        %v291 = vld [vmem:[#allocation9 + $0x188] sm:$0xff]
        %v292 = vld [vmem:[#allocation9 + $0x190] sm:$0xff]
        %v293 = vld [vmem:[#allocation9 + $0x198] sm:$0xff]
        %v294 = vld [vmem:[#allocation9 + $0x1a0] sm:$0xff]
        %v295 = vld [vmem:[#allocation9 + $0x1a8] sm:$0xff]
        %v296 = vld [vmem:[#allocation9 + $0x1b0] sm:$0xff]
        %v297 = vld [vmem:[#allocation9 + $0x1b8] sm:$0xff]
        %v298 = vld [vmem:[#allocation9 + $0x1c0] sm:$0xff]
        %v299 = vld [vmem:[#allocation9 + $0x1c8] sm:$0xff]
        %v300 = vld [vmem:[#allocation9 + $0x1d0] sm:$0xff]
        %v301 = vld [vmem:[#allocation9 + $0x1d8] sm:$0xff]
        %v302 = vld [vmem:[#allocation9 + $0x1e0] sm:$0xff]
        %v303 = vld [vmem:[#allocation9 + $0x1e8] sm:$0xff]
        %v304 = vld [vmem:[#allocation9 + $0x1f0] sm:$0xff]
        %v305 = vld [vmem:[#allocation9 + $0x1f8] sm:$0xff]
        %v306 = vlaneseq
        %v307 = vshrl.u32 %v306, 7
        %v308 = vlaneseq
        %v309 = vand.u32 %v308, 127
        %v310 = vadd.s32 %v309, 128
        %vm311 = vcmp.lt.s32.totalorder %v307, 2
        %vm312 = vcmp.lt.s32.totalorder %v309, 128
        %vm313 = vcmp.lt.s32.totalorder %v310, 128
        %vm314 = vmxor %vm311, %vm312
        %vm315 = vmxor %vm311, %vm313
        %vm316 = vmxor %vm314, 1
        %vm317 = vmxor %vm315, 1
        %v318 = vsel %vm316, 1, 0
        %v319 = vsel %vm317, 1, 0
        %v320 = vcvt.s32.f32 %v318
        %v321 = vcvt.s32.f32 %v319
        %v322 = vsel %vm311, 1, 0
        %v323 = vcvt.s32.f32 %v322
        %v324 = vsub.f32 1.0, %v323
        %s325 = smul.u32 %s21, 4
        %v326 = vld [vmem:[#allocation2] sm:$0xf]
        %v327 = vld [vmem:[#allocation3] sm:$0xf]
        %v328 = vld [vmem:[#allocation4] sm:$0xf]
        %v329 = vmul.f32 %v326, %v320
        %v330 = vmul.f32 %v326, %v321
        %v331 = vpack.c.bf16 %v329, %v329
        %v332 = vpack.c.bf16 %v330, %v330
        %v397 = vunpack.c.l.b16 %v242
        %v398 = vunpack.c.h.b16 %v242
        %v399 = vunpack.c.l.b16 %v243
        %v400 = vunpack.c.h.b16 %v243
        %v401 = vunpack.c.l.b16 %v244
        %v402 = vunpack.c.h.b16 %v244
        %v403 = vunpack.c.l.b16 %v245
        %v404 = vunpack.c.h.b16 %v245
        %v405 = vunpack.c.l.b16 %v246
        %v406 = vunpack.c.h.b16 %v246
        %v407 = vunpack.c.l.b16 %v247
        %v408 = vunpack.c.h.b16 %v247
        %v409 = vunpack.c.l.b16 %v248
        %v410 = vunpack.c.h.b16 %v248
        %v411 = vunpack.c.l.b16 %v249
        %v412 = vunpack.c.h.b16 %v249
        %v413 = vunpack.c.l.b16 %v250
        %v414 = vunpack.c.h.b16 %v250
        %v415 = vunpack.c.l.b16 %v251
        %v416 = vunpack.c.h.b16 %v251
        %v417 = vunpack.c.l.b16 %v252
        %v418 = vunpack.c.h.b16 %v252
        %v419 = vunpack.c.l.b16 %v253
        %v420 = vunpack.c.h.b16 %v253
        %v421 = vunpack.c.l.b16 %v254
        %v422 = vunpack.c.h.b16 %v254
        %v423 = vunpack.c.l.b16 %v255
        %v424 = vunpack.c.h.b16 %v255
        %v425 = vunpack.c.l.b16 %v256
        %v426 = vunpack.c.h.b16 %v256
        %v427 = vunpack.c.l.b16 %v257
        %v428 = vunpack.c.h.b16 %v257
        %v429 = vunpack.c.l.b16 %v258
        %v430 = vunpack.c.h.b16 %v258
        %v431 = vunpack.c.l.b16 %v259
        %v432 = vunpack.c.h.b16 %v259
        %v433 = vunpack.c.l.b16 %v260
        %v434 = vunpack.c.h.b16 %v260
        %v435 = vunpack.c.l.b16 %v261
        %v436 = vunpack.c.h.b16 %v261
        %v437 = vunpack.c.l.b16 %v262
        %v438 = vunpack.c.h.b16 %v262
        %v439 = vunpack.c.l.b16 %v263
        %v440 = vunpack.c.h.b16 %v263
        %v441 = vunpack.c.l.b16 %v264
        %v442 = vunpack.c.h.b16 %v264
        %v443 = vunpack.c.l.b16 %v265
        %v444 = vunpack.c.h.b16 %v265
        %v445 = vunpack.c.l.b16 %v266
        %v446 = vunpack.c.h.b16 %v266
        %v447 = vunpack.c.l.b16 %v267
        %v448 = vunpack.c.h.b16 %v267
        %v449 = vunpack.c.l.b16 %v268
        %v450 = vunpack.c.h.b16 %v268
        %v451 = vunpack.c.l.b16 %v269
        %v452 = vunpack.c.h.b16 %v269
        %v453 = vunpack.c.l.b16 %v270
        %v454 = vunpack.c.h.b16 %v270
        %v455 = vunpack.c.l.b16 %v271
        %v456 = vunpack.c.h.b16 %v271
        %v457 = vunpack.c.l.b16 %v272
        %v458 = vunpack.c.h.b16 %v272
        %v459 = vunpack.c.l.b16 %v273
        %v460 = vunpack.c.h.b16 %v273
        %v461 = vunpack.c.l.b16 %v274
        %v462 = vunpack.c.h.b16 %v274
        %v463 = vunpack.c.l.b16 %v275
        %v464 = vunpack.c.h.b16 %v275
        %v465 = vunpack.c.l.b16 %v276
        %v466 = vunpack.c.h.b16 %v276
        %v467 = vunpack.c.l.b16 %v277
        %v468 = vunpack.c.h.b16 %v277
        %v469 = vunpack.c.l.b16 %v278
        %v470 = vunpack.c.h.b16 %v278
        %v471 = vunpack.c.l.b16 %v279
        %v472 = vunpack.c.h.b16 %v279
        %v473 = vunpack.c.l.b16 %v280
        %v474 = vunpack.c.h.b16 %v280
        %v475 = vunpack.c.l.b16 %v281
        %v476 = vunpack.c.h.b16 %v281
        %v477 = vunpack.c.l.b16 %v282
        %v478 = vunpack.c.h.b16 %v282
        %v479 = vunpack.c.l.b16 %v283
        %v480 = vunpack.c.h.b16 %v283
        %v481 = vunpack.c.l.b16 %v284
        %v482 = vunpack.c.h.b16 %v284
        %v483 = vunpack.c.l.b16 %v285
        %v484 = vunpack.c.h.b16 %v285
        %v485 = vunpack.c.l.b16 %v286
        %v486 = vunpack.c.h.b16 %v286
        %v487 = vunpack.c.l.b16 %v287
        %v488 = vunpack.c.h.b16 %v287
        %v489 = vunpack.c.l.b16 %v288
        %v490 = vunpack.c.h.b16 %v288
        %v491 = vunpack.c.l.b16 %v289
        %v492 = vunpack.c.h.b16 %v289
        %v493 = vunpack.c.l.b16 %v290
        %v494 = vunpack.c.h.b16 %v290
        %v495 = vunpack.c.l.b16 %v291
        %v496 = vunpack.c.h.b16 %v291
        %v497 = vunpack.c.l.b16 %v292
        %v498 = vunpack.c.h.b16 %v292
        %v499 = vunpack.c.l.b16 %v293
        %v500 = vunpack.c.h.b16 %v293
        %v501 = vunpack.c.l.b16 %v294
        %v502 = vunpack.c.h.b16 %v294
        %v503 = vunpack.c.l.b16 %v295
        %v504 = vunpack.c.h.b16 %v295
        %v505 = vunpack.c.l.b16 %v296
        %v506 = vunpack.c.h.b16 %v296
        %v507 = vunpack.c.l.b16 %v297
        %v508 = vunpack.c.h.b16 %v297
        %v509 = vunpack.c.l.b16 %v298
        %v510 = vunpack.c.h.b16 %v298
        %v511 = vunpack.c.l.b16 %v299
        %v512 = vunpack.c.h.b16 %v299
        %v513 = vunpack.c.l.b16 %v300
        %v514 = vunpack.c.h.b16 %v300
        %v515 = vunpack.c.l.b16 %v301
        %v516 = vunpack.c.h.b16 %v301
        %v517 = vunpack.c.l.b16 %v302
        %v518 = vunpack.c.h.b16 %v302
        %v519 = vunpack.c.l.b16 %v303
        %v520 = vunpack.c.h.b16 %v303
        %v521 = vunpack.c.l.b16 %v304
        %v522 = vunpack.c.h.b16 %v304
        %v523 = vunpack.c.l.b16 %v305
        %v524 = vunpack.c.h.b16 %v305
        %v525 = vpack.c.b16 %v401, %v397
        %v526 = vpack.c.b16 %v402, %v398
        %v527 = vpack.c.b16 %v403, %v399
        %v528 = vpack.c.b16 %v404, %v400
        %v529 = vpack.c.b16 %v409, %v405
        %v530 = vpack.c.b16 %v410, %v406
        %v531 = vpack.c.b16 %v411, %v407
        %v532 = vpack.c.b16 %v412, %v408
        %v533 = vpack.c.b16 %v417, %v413
        %v534 = vpack.c.b16 %v418, %v414
        %v535 = vpack.c.b16 %v419, %v415
        %v536 = vpack.c.b16 %v420, %v416
        %v537 = vpack.c.b16 %v425, %v421
        %v538 = vpack.c.b16 %v426, %v422
        %v539 = vpack.c.b16 %v427, %v423
        %v540 = vpack.c.b16 %v428, %v424
        %v541 = vpack.c.b16 %v433, %v429
        %v542 = vpack.c.b16 %v434, %v430
        %v543 = vpack.c.b16 %v435, %v431
        %v544 = vpack.c.b16 %v436, %v432
        %v545 = vpack.c.b16 %v441, %v437
        %v546 = vpack.c.b16 %v442, %v438
        %v547 = vpack.c.b16 %v443, %v439
        %v548 = vpack.c.b16 %v444, %v440
        %v549 = vpack.c.b16 %v449, %v445
        %v550 = vpack.c.b16 %v450, %v446
        %v551 = vpack.c.b16 %v451, %v447
        %v552 = vpack.c.b16 %v452, %v448
        %v553 = vpack.c.b16 %v457, %v453
        %v554 = vpack.c.b16 %v458, %v454
        %v555 = vpack.c.b16 %v459, %v455
        %v556 = vpack.c.b16 %v460, %v456
        %v557 = vpack.c.b16 %v465, %v461
        %v558 = vpack.c.b16 %v466, %v462
        %v559 = vpack.c.b16 %v467, %v463
        %v560 = vpack.c.b16 %v468, %v464
        %v561 = vpack.c.b16 %v473, %v469
        %v562 = vpack.c.b16 %v474, %v470
        %v563 = vpack.c.b16 %v475, %v471
        %v564 = vpack.c.b16 %v476, %v472
        %v565 = vpack.c.b16 %v481, %v477
        %v566 = vpack.c.b16 %v482, %v478
        %v567 = vpack.c.b16 %v483, %v479
        %v568 = vpack.c.b16 %v484, %v480
        %v569 = vpack.c.b16 %v489, %v485
        %v570 = vpack.c.b16 %v490, %v486
        %v571 = vpack.c.b16 %v491, %v487
        %v572 = vpack.c.b16 %v492, %v488
        %v573 = vpack.c.b16 %v497, %v493
        %v574 = vpack.c.b16 %v498, %v494
        %v575 = vpack.c.b16 %v499, %v495
        %v576 = vpack.c.b16 %v500, %v496
        %v577 = vpack.c.b16 %v505, %v501
        %v578 = vpack.c.b16 %v506, %v502
        %v579 = vpack.c.b16 %v507, %v503
        %v580 = vpack.c.b16 %v508, %v504
        %v581 = vpack.c.b16 %v513, %v509
        %v582 = vpack.c.b16 %v514, %v510
        %v583 = vpack.c.b16 %v515, %v511
        %v584 = vpack.c.b16 %v516, %v512
        %v585 = vpack.c.b16 %v521, %v517
        %v586 = vpack.c.b16 %v522, %v518
        %v587 = vpack.c.b16 %v523, %v519
        %v588 = vpack.c.b16 %v524, %v520
        %653 = vmatprep.subr.bf16.mxu0 %v526
        %654 = vmatpush1.bf16.msra.mxu0 %v525
        %655 = vmatprep.subr.bf16.mxu0 %v530
        %656 = vmatpush1.bf16.msra.mxu0 %v529
        %657 = vmatprep.subr.bf16.mxu0 %v534
        %658 = vmatpush1.bf16.msra.mxu0 %v533
        %659 = vmatprep.subr.bf16.mxu0 %v538
        %660 = vmatpush1.bf16.msra.mxu0 %v537
        %661 = vmatprep.subr.bf16.mxu0 %v542
        %662 = vmatpush1.bf16.msra.mxu0 %v541
        %663 = vmatprep.subr.bf16.mxu0 %v546
        %664 = vmatpush1.bf16.msra.mxu0 %v545
        %665 = vmatprep.subr.bf16.mxu0 %v550
        %666 = vmatpush1.bf16.msra.mxu0 %v549
        %667 = vmatprep.subr.bf16.mxu0 %v554
        %668 = vmatpush1.bf16.msra.mxu0 %v553
        %669 = vmatprep.subr.bf16.mxu0 %v558
        %670 = vmatpush1.bf16.msra.mxu0 %v557
        %671 = vmatprep.subr.bf16.mxu0 %v562
        %672 = vmatpush1.bf16.msra.mxu0 %v561
        %673 = vmatprep.subr.bf16.mxu0 %v566
        %674 = vmatpush1.bf16.msra.mxu0 %v565
        %675 = vmatprep.subr.bf16.mxu0 %v570
        %676 = vmatpush1.bf16.msra.mxu0 %v569
        %677 = vmatprep.subr.bf16.mxu0 %v574
        %678 = vmatpush1.bf16.msra.mxu0 %v573
        %679 = vmatprep.subr.bf16.mxu0 %v578
        %680 = vmatpush1.bf16.msra.mxu0 %v577
        %681 = vmatprep.subr.bf16.mxu0 %v582
        %682 = vmatpush1.bf16.msra.mxu0 %v581
        %683 = vmatprep.subr.bf16.mxu0 %v586
        %684 = vmatpush1.bf16.msra.mxu0 %v585
        %685 = vmatprep.mubr.bf16.mxu0 %v332
        %686 = vmatmul.mubr.bf16.gmra.mrb[0].mxu0 %v331
        %v687 = vpop.f32.mrb[0].mxu0
        %v688 = vadd.f32 0.0, %v687
        %v689 = vpop.f32.mrb[0].mxu0
        %v690 = vadd.f32 0.0, %v689
        %v691 = vpop.f32.mrb[0].mxu0
        %v692 = vpop.f32.mrb[0].mxu0
        %693 = vdwg.mxu0
        %694 = vmatprep.subr.bf16.mxu0 %v528
        %695 = vmatpush1.bf16.msra.mxu0 %v527
        %696 = vmatprep.subr.bf16.mxu0 %v532
        %697 = vmatpush1.bf16.msra.mxu0 %v531
        %698 = vmatprep.subr.bf16.mxu0 %v536
        %699 = vmatpush1.bf16.msra.mxu0 %v535
        %700 = vmatprep.subr.bf16.mxu0 %v540
        %701 = vmatpush1.bf16.msra.mxu0 %v539
        %702 = vmatprep.subr.bf16.mxu0 %v544
        %703 = vmatpush1.bf16.msra.mxu0 %v543
        %704 = vmatprep.subr.bf16.mxu0 %v548
        %705 = vmatpush1.bf16.msra.mxu0 %v547
        %706 = vmatprep.subr.bf16.mxu0 %v552
        %707 = vmatpush1.bf16.msra.mxu0 %v551
        %708 = vmatprep.subr.bf16.mxu0 %v556
        %709 = vmatpush1.bf16.msra.mxu0 %v555
        %710 = vmatprep.subr.bf16.mxu0 %v560
        %711 = vmatpush1.bf16.msra.mxu0 %v559
        %712 = vmatprep.subr.bf16.mxu0 %v564
        %713 = vmatpush1.bf16.msra.mxu0 %v563
        %714 = vmatprep.subr.bf16.mxu0 %v568
        %715 = vmatpush1.bf16.msra.mxu0 %v567
        %716 = vmatprep.subr.bf16.mxu0 %v572
        %717 = vmatpush1.bf16.msra.mxu0 %v571
        %718 = vmatprep.subr.bf16.mxu0 %v576
        %719 = vmatpush1.bf16.msra.mxu0 %v575
        %720 = vmatprep.subr.bf16.mxu0 %v580
        %721 = vmatpush1.bf16.msra.mxu0 %v579
        %722 = vmatprep.subr.bf16.mxu0 %v584
        %723 = vmatpush1.bf16.msra.mxu0 %v583
        %724 = vmatprep.subr.bf16.mxu0 %v588
        %725 = vmatpush1.bf16.msra.mxu0 %v587
        %726 = vmatprep.mubr.bf16.mxu0 %v332
        %727 = vmatmul.mubr.bf16.gmra.mrb[0].mxu0 %v331
        %v728 = vpop.f32.mrb[0].mxu0
        %v729 = vadd.f32 0.0, %v728
        %v730 = vpop.f32.mrb[0].mxu0
        %v731 = vadd.f32 0.0, %v730
        %v732 = vpop.f32.mrb[0].mxu0
        %v733 = vpop.f32.mrb[0].mxu0
        %734 = vdwg.mxu0
        %v735 = vld [vmem:[%s205] sm:$0xff]
        %v736 = vunpack.c.l.bf16 %v735
        %v737 = vunpack.c.h.bf16 %v735
        %v742 = vcombine.low %v688, %v690
        %v743 = vcombine.low %v729, %v731
        %v746 = vadd.f32 %v736, %v742
        %v747 = vadd.f32 %v737, %v743
        %v748 = vxor.u32 %v746, 2147483648
        %v749 = vxor.u32 %v747, 2147483648
        %v750 = vmul.f32 %v748, 1.442695
        %v751 = vpow.pop %v750
        %v752 = vmul.f32 %v749, 1.442695
        %v753 = vpow.pop %v752
        %v754 = vadd.f32 %v751, 1.0
        %v755 = vadd.f32 %v753, 1.0
        %v756 = vrcp.pop %v754
        %v757 = vmul.f32 1.0, %v756
        %v758 = vrcp.pop %v755
        %v759 = vmul.f32 1.0, %v758
        %v761 = vrot.slane %v747, 4
        %v763 = vtanh.pop %v761
        %v765 = vrot.slane %v757, 4
        %v767 = vmul.f32 %v765, %v327
        %v768 = vmul.f32 %v757, %v763
        %v769 = vadd.f32 %v767, %v768
        %v770 = vtanh.pop %v769
        %v771 = vmul.f32 %v759, %v770
        %s772 = sld [smem:[#allocation11 + %s325]]
        %s773 = ssub.s32 7, %s325
        %s774 = sld [smem:[#allocation11 + %s773]]
        %v775 = vstv %s772
        %v776 = vmul.f32 %v323, %v775
        %v777 = vstv %s774
        %v778 = vmul.f32 %v324, %v777
        %v779 = vadd.f32 %v776, %v778
        %v780 = vmul.f32 %v779, %v771
        %v781 = vadd.f32 %v328, %v780
        %v782 = vmul.f32 %v771, %v320
        %v783 = vmul.f32 %v771, %v321
        %v784 = vpack.c.bf16 %v782, %v782
        %v785 = vpack.c.bf16 %v783, %v783
        %786 = vmatprep.subr.bf16.mxu0 %v526
        %787 = vmatpush1.bf16.msra.mxu0 %v525
        %788 = vmatprep.subr.bf16.mxu0 %v530
        %789 = vmatpush1.bf16.msra.mxu0 %v529
        %790 = vmatprep.subr.bf16.mxu0 %v534
        %791 = vmatpush1.bf16.msra.mxu0 %v533
        %792 = vmatprep.subr.bf16.mxu0 %v538
        %793 = vmatpush1.bf16.msra.mxu0 %v537
        %794 = vmatprep.subr.bf16.mxu0 %v542
        %795 = vmatpush1.bf16.msra.mxu0 %v541
        %796 = vmatprep.subr.bf16.mxu0 %v546
        %797 = vmatpush1.bf16.msra.mxu0 %v545
        %798 = vmatprep.subr.bf16.mxu0 %v550
        %799 = vmatpush1.bf16.msra.mxu0 %v549
        %800 = vmatprep.subr.bf16.mxu0 %v554
        %801 = vmatpush1.bf16.msra.mxu0 %v553
        %802 = vmatprep.subr.bf16.mxu0 %v558
        %803 = vmatpush1.bf16.msra.mxu0 %v557
        %804 = vmatprep.subr.bf16.mxu0 %v562
        %805 = vmatpush1.bf16.msra.mxu0 %v561
        %806 = vmatprep.subr.bf16.mxu0 %v566
        %807 = vmatpush1.bf16.msra.mxu0 %v565
        %808 = vmatprep.subr.bf16.mxu0 %v570
        %809 = vmatpush1.bf16.msra.mxu0 %v569
        %810 = vmatprep.subr.bf16.mxu0 %v574
        %811 = vmatpush1.bf16.msra.mxu0 %v573
        %812 = vmatprep.subr.bf16.mxu0 %v578
        %813 = vmatpush1.bf16.msra.mxu0 %v577
        %814 = vmatprep.subr.bf16.mxu0 %v582
        %815 = vmatpush1.bf16.msra.mxu0 %v581
        %816 = vmatprep.subr.bf16.mxu0 %v586
        %817 = vmatpush1.bf16.msra.mxu0 %v585
        %818 = vmatprep.mubr.bf16.mxu0 %v785
        %819 = vmatmul.mubr.bf16.gmra.mrb[0].mxu0 %v784
        %v820 = vpop.f32.mrb[0].mxu0
        %v821 = vadd.f32 0.0, %v820
        %v822 = vpop.f32.mrb[0].mxu0
        %v823 = vadd.f32 0.0, %v822
        %v824 = vpop.f32.mrb[0].mxu0
        %v825 = vpop.f32.mrb[0].mxu0
        %826 = vdwg.mxu0
        %827 = vmatprep.subr.bf16.mxu0 %v528
        %828 = vmatpush1.bf16.msra.mxu0 %v527
        %829 = vmatprep.subr.bf16.mxu0 %v532
        %830 = vmatpush1.bf16.msra.mxu0 %v531
        %831 = vmatprep.subr.bf16.mxu0 %v536
        %832 = vmatpush1.bf16.msra.mxu0 %v535
        %833 = vmatprep.subr.bf16.mxu0 %v540
        %834 = vmatpush1.bf16.msra.mxu0 %v539
        %835 = vmatprep.subr.bf16.mxu0 %v544
        %836 = vmatpush1.bf16.msra.mxu0 %v543
        %837 = vmatprep.subr.bf16.mxu0 %v548
        %838 = vmatpush1.bf16.msra.mxu0 %v547
        %839 = vmatprep.subr.bf16.mxu0 %v552
        %840 = vmatpush1.bf16.msra.mxu0 %v551
        %841 = vmatprep.subr.bf16.mxu0 %v556
        %842 = vmatpush1.bf16.msra.mxu0 %v555
        %843 = vmatprep.subr.bf16.mxu0 %v560
        %844 = vmatpush1.bf16.msra.mxu0 %v559
        %845 = vmatprep.subr.bf16.mxu0 %v564
        %846 = vmatpush1.bf16.msra.mxu0 %v563
        %847 = vmatprep.subr.bf16.mxu0 %v568
        %848 = vmatpush1.bf16.msra.mxu0 %v567
        %849 = vmatprep.subr.bf16.mxu0 %v572
        %850 = vmatpush1.bf16.msra.mxu0 %v571
        %851 = vmatprep.subr.bf16.mxu0 %v576
        %852 = vmatpush1.bf16.msra.mxu0 %v575
        %853 = vmatprep.subr.bf16.mxu0 %v580
        %854 = vmatpush1.bf16.msra.mxu0 %v579
        %855 = vmatprep.subr.bf16.mxu0 %v584
        %856 = vmatpush1.bf16.msra.mxu0 %v583
        %857 = vmatprep.subr.bf16.mxu0 %v588
        %858 = vmatpush1.bf16.msra.mxu0 %v587
        %859 = vmatprep.mubr.bf16.mxu0 %v785
        %860 = vmatmul.mubr.bf16.gmra.mrb[0].mxu0 %v784
        %v861 = vpop.f32.mrb[0].mxu0
        %v862 = vadd.f32 0.0, %v861
        %v863 = vpop.f32.mrb[0].mxu0
        %v864 = vadd.f32 0.0, %v863
        %v865 = vpop.f32.mrb[0].mxu0
        %v866 = vpop.f32.mrb[0].mxu0
        %867 = vdwg.mxu0
        %s868 = scalar_lea.vmem %s205, 8 [#allocation5]
        %v869 = vld [vmem:[%s868] sm:$0xff]
        %v870 = vunpack.c.l.bf16 %v869
        %v871 = vunpack.c.h.bf16 %v869
        %v876 = vcombine.low %v821, %v823
        %v877 = vcombine.low %v862, %v864
        %v880 = vadd.f32 %v870, %v876
        %v881 = vadd.f32 %v871, %v877
        %v882 = vxor.u32 %v880, 2147483648
        %v883 = vxor.u32 %v881, 2147483648
        %v884 = vmul.f32 %v882, 1.442695
        %v885 = vpow.pop %v884
        %v886 = vmul.f32 %v883, 1.442695
        %v887 = vpow.pop %v886
        %v888 = vadd.f32 %v885, 1.0
        %v889 = vadd.f32 %v887, 1.0
        %v890 = vrcp.pop %v888
        %v891 = vmul.f32 1.0, %v890
        %v892 = vrcp.pop %v889
        %v893 = vmul.f32 1.0, %v892
        %v895 = vrot.slane %v881, 4
        %v897 = vtanh.pop %v895
        %v899 = vrot.slane %v891, 4
        %v901 = vmul.f32 %v899, %v769
        %v902 = vmul.f32 %v891, %v897
        %v903 = vadd.f32 %v901, %v902
        %v904 = vtanh.pop %v903
        %v905 = vmul.f32 %v893, %v904
        %s906 = sadd.s32 %s325, 1
        %s907 = sld [smem:[#allocation11 + %s906]]
        %s908 = ssub.s32 6, %s325
        %s909 = sld [smem:[#allocation11 + %s908]]
        %v910 = vstv %s907
        %v911 = vmul.f32 %v323, %v910
        %v912 = vstv %s909
        %v913 = vmul.f32 %v324, %v912
        %v914 = vadd.f32 %v911, %v913
        %v915 = vmul.f32 %v914, %v905
        %v916 = vadd.f32 %v781, %v915
        %v917 = vmul.f32 %v905, %v320
        %v918 = vmul.f32 %v905, %v321
        %v919 = vpack.c.bf16 %v917, %v917
        %v920 = vpack.c.bf16 %v918, %v918
        %921 = vmatprep.subr.bf16.mxu0 %v526
        %922 = vmatpush1.bf16.msra.mxu0 %v525
        %923 = vmatprep.subr.bf16.mxu0 %v530
        %924 = vmatpush1.bf16.msra.mxu0 %v529
        %925 = vmatprep.subr.bf16.mxu0 %v534
        %926 = vmatpush1.bf16.msra.mxu0 %v533
        %927 = vmatprep.subr.bf16.mxu0 %v538
        %928 = vmatpush1.bf16.msra.mxu0 %v537
        %929 = vmatprep.subr.bf16.mxu0 %v542
        %930 = vmatpush1.bf16.msra.mxu0 %v541
        %931 = vmatprep.subr.bf16.mxu0 %v546
        %932 = vmatpush1.bf16.msra.mxu0 %v545
        %933 = vmatprep.subr.bf16.mxu0 %v550
        %934 = vmatpush1.bf16.msra.mxu0 %v549
        %935 = vmatprep.subr.bf16.mxu0 %v554
        %936 = vmatpush1.bf16.msra.mxu0 %v553
        %937 = vmatprep.subr.bf16.mxu0 %v558
        %938 = vmatpush1.bf16.msra.mxu0 %v557
        %939 = vmatprep.subr.bf16.mxu0 %v562
        %940 = vmatpush1.bf16.msra.mxu0 %v561
        %941 = vmatprep.subr.bf16.mxu0 %v566
        %942 = vmatpush1.bf16.msra.mxu0 %v565
        %943 = vmatprep.subr.bf16.mxu0 %v570
        %944 = vmatpush1.bf16.msra.mxu0 %v569
        %945 = vmatprep.subr.bf16.mxu0 %v574
        %946 = vmatpush1.bf16.msra.mxu0 %v573
        %947 = vmatprep.subr.bf16.mxu0 %v578
        %948 = vmatpush1.bf16.msra.mxu0 %v577
        %949 = vmatprep.subr.bf16.mxu0 %v582
        %950 = vmatpush1.bf16.msra.mxu0 %v581
        %951 = vmatprep.subr.bf16.mxu0 %v586
        %952 = vmatpush1.bf16.msra.mxu0 %v585
        %953 = vmatprep.mubr.bf16.mxu0 %v920
        %954 = vmatmul.mubr.bf16.gmra.mrb[0].mxu0 %v919
        %v955 = vpop.f32.mrb[0].mxu0
        %v956 = vadd.f32 0.0, %v955
        %v957 = vpop.f32.mrb[0].mxu0
        %v958 = vadd.f32 0.0, %v957
        %v959 = vpop.f32.mrb[0].mxu0
        %v960 = vpop.f32.mrb[0].mxu0
        %961 = vdwg.mxu0
        %962 = vmatprep.subr.bf16.mxu0 %v528
        %963 = vmatpush1.bf16.msra.mxu0 %v527
        %964 = vmatprep.subr.bf16.mxu0 %v532
        %965 = vmatpush1.bf16.msra.mxu0 %v531
        %966 = vmatprep.subr.bf16.mxu0 %v536
        %967 = vmatpush1.bf16.msra.mxu0 %v535
        %968 = vmatprep.subr.bf16.mxu0 %v540
        %969 = vmatpush1.bf16.msra.mxu0 %v539
        %970 = vmatprep.subr.bf16.mxu0 %v544
        %971 = vmatpush1.bf16.msra.mxu0 %v543
        %972 = vmatprep.subr.bf16.mxu0 %v548
        %973 = vmatpush1.bf16.msra.mxu0 %v547
        %974 = vmatprep.subr.bf16.mxu0 %v552
        %975 = vmatpush1.bf16.msra.mxu0 %v551
        %976 = vmatprep.subr.bf16.mxu0 %v556
        %977 = vmatpush1.bf16.msra.mxu0 %v555
        %978 = vmatprep.subr.bf16.mxu0 %v560
        %979 = vmatpush1.bf16.msra.mxu0 %v559
        %980 = vmatprep.subr.bf16.mxu0 %v564
        %981 = vmatpush1.bf16.msra.mxu0 %v563
        %982 = vmatprep.subr.bf16.mxu0 %v568
        %983 = vmatpush1.bf16.msra.mxu0 %v567
        %984 = vmatprep.subr.bf16.mxu0 %v572
        %985 = vmatpush1.bf16.msra.mxu0 %v571
        %986 = vmatprep.subr.bf16.mxu0 %v576
        %987 = vmatpush1.bf16.msra.mxu0 %v575
        %988 = vmatprep.subr.bf16.mxu0 %v580
        %989 = vmatpush1.bf16.msra.mxu0 %v579
        %990 = vmatprep.subr.bf16.mxu0 %v584
        %991 = vmatpush1.bf16.msra.mxu0 %v583
        %992 = vmatprep.subr.bf16.mxu0 %v588
        %993 = vmatpush1.bf16.msra.mxu0 %v587
        %994 = vmatprep.mubr.bf16.mxu0 %v920
        %995 = vmatmul.mubr.bf16.gmra.mrb[0].mxu0 %v919
        %v996 = vpop.f32.mrb[0].mxu0
        %v997 = vadd.f32 0.0, %v996
        %v998 = vpop.f32.mrb[0].mxu0
        %v999 = vadd.f32 0.0, %v998
        %v1000 = vpop.f32.mrb[0].mxu0
        %v1001 = vpop.f32.mrb[0].mxu0
        %1002 = vdwg.mxu0
        %s1003 = scalar_lea.vmem %s205, 16 [#allocation5]
        %v1004 = vld [vmem:[%s1003] sm:$0xff]
        %v1005 = vunpack.c.l.bf16 %v1004
        %v1006 = vunpack.c.h.bf16 %v1004
        %v1011 = vcombine.low %v956, %v958
        %v1012 = vcombine.low %v997, %v999
        %v1015 = vadd.f32 %v1005, %v1011
        %v1016 = vadd.f32 %v1006, %v1012
        %v1017 = vxor.u32 %v1015, 2147483648
        %v1018 = vxor.u32 %v1016, 2147483648
        %v1019 = vmul.f32 %v1017, 1.442695
        %v1020 = vpow.pop %v1019
        %v1021 = vmul.f32 %v1018, 1.442695
        %v1022 = vpow.pop %v1021
        %v1023 = vadd.f32 %v1020, 1.0
        %v1024 = vadd.f32 %v1022, 1.0
        %v1025 = vrcp.pop %v1023
        %v1026 = vmul.f32 1.0, %v1025
        %v1027 = vrcp.pop %v1024
        %v1028 = vmul.f32 1.0, %v1027
        %v1030 = vrot.slane %v1016, 4
        %v1032 = vtanh.pop %v1030
        %v1034 = vrot.slane %v1026, 4
        %v1036 = vmul.f32 %v1034, %v903
        %v1037 = vmul.f32 %v1026, %v1032
        %v1038 = vadd.f32 %v1036, %v1037
        %v1039 = vtanh.pop %v1038
        %v1040 = vmul.f32 %v1028, %v1039
        %s1041 = sadd.s32 %s325, 2
        %s1042 = sld [smem:[#allocation11 + %s1041]]
        %s1043 = ssub.s32 5, %s325
        %s1044 = sld [smem:[#allocation11 + %s1043]]
        %v1045 = vstv %s1042
        %v1046 = vmul.f32 %v323, %v1045
        %v1047 = vstv %s1044
        %v1048 = vmul.f32 %v324, %v1047
        %v1049 = vadd.f32 %v1046, %v1048
        %v1050 = vmul.f32 %v1049, %v1040
        %v1051 = vadd.f32 %v916, %v1050
        %v1052 = vmul.f32 %v1040, %v320
        %v1053 = vmul.f32 %v1040, %v321
        %v1054 = vpack.c.bf16 %v1052, %v1052
        %v1055 = vpack.c.bf16 %v1053, %v1053
        %1056 = vmatprep.subr.bf16.mxu0 %v526
        %1057 = vmatpush1.bf16.msra.mxu0 %v525
        %1058 = vmatprep.subr.bf16.mxu0 %v530
        %1059 = vmatpush1.bf16.msra.mxu0 %v529
        %1060 = vmatprep.subr.bf16.mxu0 %v534
        %1061 = vmatpush1.bf16.msra.mxu0 %v533
        %1062 = vmatprep.subr.bf16.mxu0 %v538
        %1063 = vmatpush1.bf16.msra.mxu0 %v537
        %1064 = vmatprep.subr.bf16.mxu0 %v542
        %1065 = vmatpush1.bf16.msra.mxu0 %v541
        %1066 = vmatprep.subr.bf16.mxu0 %v546
        %1067 = vmatpush1.bf16.msra.mxu0 %v545
        %1068 = vmatprep.subr.bf16.mxu0 %v550
        %1069 = vmatpush1.bf16.msra.mxu0 %v549
        %1070 = vmatprep.subr.bf16.mxu0 %v554
        %1071 = vmatpush1.bf16.msra.mxu0 %v553
        %1072 = vmatprep.subr.bf16.mxu0 %v558
        %1073 = vmatpush1.bf16.msra.mxu0 %v557
        %1074 = vmatprep.subr.bf16.mxu0 %v562
        %1075 = vmatpush1.bf16.msra.mxu0 %v561
        %1076 = vmatprep.subr.bf16.mxu0 %v566
        %1077 = vmatpush1.bf16.msra.mxu0 %v565
        %1078 = vmatprep.subr.bf16.mxu0 %v570
        %1079 = vmatpush1.bf16.msra.mxu0 %v569
        %1080 = vmatprep.subr.bf16.mxu0 %v574
        %1081 = vmatpush1.bf16.msra.mxu0 %v573
        %1082 = vmatprep.subr.bf16.mxu0 %v578
        %1083 = vmatpush1.bf16.msra.mxu0 %v577
        %1084 = vmatprep.subr.bf16.mxu0 %v582
        %1085 = vmatpush1.bf16.msra.mxu0 %v581
        %1086 = vmatprep.subr.bf16.mxu0 %v586
        %1087 = vmatpush1.bf16.msra.mxu0 %v585
        %1088 = vmatprep.mubr.bf16.mxu0 %v1055
        %1089 = vmatmul.mubr.bf16.gmra.mrb[0].mxu0 %v1054
        %v1090 = vpop.f32.mrb[0].mxu0
        %v1091 = vadd.f32 0.0, %v1090
        %v1092 = vpop.f32.mrb[0].mxu0
        %v1093 = vadd.f32 0.0, %v1092
        %v1094 = vpop.f32.mrb[0].mxu0
        %v1095 = vpop.f32.mrb[0].mxu0
        %1096 = vdwg.mxu0
        %1097 = vmatprep.subr.bf16.mxu0 %v528
        %1098 = vmatpush1.bf16.msra.mxu0 %v527
        %1099 = vmatprep.subr.bf16.mxu0 %v532
        %1100 = vmatpush1.bf16.msra.mxu0 %v531
        %1101 = vmatprep.subr.bf16.mxu0 %v536
        %1102 = vmatpush1.bf16.msra.mxu0 %v535
        %1103 = vmatprep.subr.bf16.mxu0 %v540
        %1104 = vmatpush1.bf16.msra.mxu0 %v539
        %1105 = vmatprep.subr.bf16.mxu0 %v544
        %1106 = vmatpush1.bf16.msra.mxu0 %v543
        %1107 = vmatprep.subr.bf16.mxu0 %v548
        %1108 = vmatpush1.bf16.msra.mxu0 %v547
        %1109 = vmatprep.subr.bf16.mxu0 %v552
        %1110 = vmatpush1.bf16.msra.mxu0 %v551
        %1111 = vmatprep.subr.bf16.mxu0 %v556
        %1112 = vmatpush1.bf16.msra.mxu0 %v555
        %1113 = vmatprep.subr.bf16.mxu0 %v560
        %1114 = vmatpush1.bf16.msra.mxu0 %v559
        %1115 = vmatprep.subr.bf16.mxu0 %v564
        %1116 = vmatpush1.bf16.msra.mxu0 %v563
        %1117 = vmatprep.subr.bf16.mxu0 %v568
        %1118 = vmatpush1.bf16.msra.mxu0 %v567
        %1119 = vmatprep.subr.bf16.mxu0 %v572
        %1120 = vmatpush1.bf16.msra.mxu0 %v571
        %1121 = vmatprep.subr.bf16.mxu0 %v576
        %1122 = vmatpush1.bf16.msra.mxu0 %v575
        %1123 = vmatprep.subr.bf16.mxu0 %v580
        %1124 = vmatpush1.bf16.msra.mxu0 %v579
        %1125 = vmatprep.subr.bf16.mxu0 %v584
        %1126 = vmatpush1.bf16.msra.mxu0 %v583
        %1127 = vmatprep.subr.bf16.mxu0 %v588
        %1128 = vmatpush1.bf16.msra.mxu0 %v587
        %1129 = vmatprep.mubr.bf16.mxu0 %v1055
        %1130 = vmatmul.mubr.bf16.gmra.mrb[0].mxu0 %v1054
        %v1131 = vpop.f32.mrb[0].mxu0
        %v1132 = vadd.f32 0.0, %v1131
        %v1133 = vpop.f32.mrb[0].mxu0
        %v1134 = vadd.f32 0.0, %v1133
        %v1135 = vpop.f32.mrb[0].mxu0
        %v1136 = vpop.f32.mrb[0].mxu0
        %1137 = vdwg.mxu0
        %s1138 = scalar_lea.vmem %s205, 24 [#allocation5]
        %v1139 = vld [vmem:[%s1138] sm:$0xff]
        %v1140 = vunpack.c.l.bf16 %v1139
        %v1141 = vunpack.c.h.bf16 %v1139
        %v1146 = vcombine.low %v1091, %v1093
        %v1147 = vcombine.low %v1132, %v1134
        %v1150 = vadd.f32 %v1140, %v1146
        %v1151 = vadd.f32 %v1141, %v1147
        %v1152 = vxor.u32 %v1150, 2147483648
        %v1153 = vxor.u32 %v1151, 2147483648
        %v1154 = vmul.f32 %v1152, 1.442695
        %v1155 = vpow.pop %v1154
        %v1156 = vmul.f32 %v1153, 1.442695
        %v1157 = vpow.pop %v1156
        %v1158 = vadd.f32 %v1155, 1.0
        %v1159 = vadd.f32 %v1157, 1.0
        %v1160 = vrcp.pop %v1158
        %v1161 = vmul.f32 1.0, %v1160
        %v1162 = vrcp.pop %v1159
        %v1163 = vmul.f32 1.0, %v1162
        %v1165 = vrot.slane %v1151, 4
        %v1167 = vtanh.pop %v1165
        %v1169 = vrot.slane %v1161, 4
        %v1171 = vmul.f32 %v1169, %v1038
        %v1172 = vmul.f32 %v1161, %v1167
        %v1173 = vadd.f32 %v1171, %v1172
        %v1174 = vtanh.pop %v1173
        %v1175 = vmul.f32 %v1163, %v1174
        %s1176 = sadd.s32 %s325, 3
        %s1177 = sld [smem:[#allocation11 + %s1176]]
        %s1178 = ssub.s32 4, %s325
        %s1179 = sld [smem:[#allocation11 + %s1178]]
        %v1180 = vstv %s1177
        %v1181 = vmul.f32 %v323, %v1180
        %v1182 = vstv %s1179
        %v1183 = vmul.f32 %v324, %v1182
        %v1184 = vadd.f32 %v1181, %v1183
        %v1185 = vmul.f32 %v1184, %v1175
        %v1186 = vadd.f32 %v1051, %v1185
        %1187 = vst [vmem:[#allocation2] sm:$0xf] %v1175
        %1188 = vst [vmem:[#allocation3] sm:$0xf] %v1173
        %1189 = vst [vmem:[#allocation4] sm:$0xf] %v1186
        %p1190 = scmp.eq.s32.totalorder %s21, 1
        // Predicated region
        $region53: #{tpu_custom_call.1} parent=35 // pred_check
          %p1191 = pneg %p1190
        $region54: #{tpu_custom_call.1} parent=35 // pred_check_branch
          %1193 = sbr.rel (%p1191) target = $region56
        $region55: #{tpu_custom_call.1} parent=35 // pred_region
          %v1195 = vrot.slane %v1186, 2
          %v1197 = vld [vmem:[%s3] sm:$0x3]
          %v1199 = vlaneseq
          %v1200 = vshrl.u32 %v1199, 7
          %v1201 = vsub.s32 0, %v1200
          %v1202 = vrot.slane %v1197, %v1201
          %v1203 = vlaneseq
          %v1204 = vshrl.u32 %v1203, 7
          %v1205 = vsub.s32 1, %v1204
          %v1206 = vrot.slane %v1197, %v1205
          %v1209 = vadd.f32 %v1186, %v1202
          %v1210 = vadd.f32 %v1195, %v1206
          %v1213 = vcombine.low %v1209, %v1210
          %v1215 = vunpack.c.l.s4 1983009808
          %v1216 = vunpack.c.0.s8 %v1215
          %v1217 = vlaneseq
          %v1218 = vshrl.u32 %v1217, 7
          %v1219 = vsub.s32 %v1216, %v1218
          %v1220 = vrot.slane %v1213, %v1219
          %1222 = vst [vmem:[#allocation12] sm:$0xf] %v1220
        $region56: #{tpu_custom_call.1} parent=35 // pred_fallthru
          _
        // Predicated region
        $region57: #{tpu_custom_call.1} parent=35 // pred_check
          %p1223 = pneg %p123
        $region58: #{tpu_custom_call.1} parent=35 // pred_check_branch
          %1225 = sbr.rel (%p1223) target = $region60
        $region59: #{tpu_custom_call.1} parent=35 // pred_region
          %s1227 = ssub.s32 64, 64
          %1228 = vsyncadd [#allocation7], %s1227
          %s1230 = sshll.u32 [#allocation12], 4
          %s1231 = int_to_ptr.vmem [resolvable:$true] %s1230
          %1233 = dma.vmem_to_hbm [thread:$0]  %s1231, 64, %s4, [#allocation7]
        $region60: #{tpu_custom_call.1} parent=35 // pred_fallthru
          _
        // Predicated region
        $region61: #{tpu_custom_call.1} parent=35 // pred_check
          %p1234 = pneg %p123
        $region62: #{tpu_custom_call.1} parent=35 // pred_check_branch
          %1236 = sbr.rel (%p1234) target = $region64
        $region63: #{tpu_custom_call.1} parent=35 // pred_region
          %1237 = dma.done [#allocation7], 64
        $region64: #{tpu_custom_call.1} parent=35 // pred_fallthru
          _
      $region36: #{tpu_custom_call.1} parent=5 // pred_fallthru
        _
      %p1238 = scmp.le.s32.totalorder 2, %s16
      // Predicated region
      $region65: #{tpu_custom_call.1} parent=5 // pred_check
        %p1239 = pneg %p1238
      $region66: #{tpu_custom_call.1} parent=5 // pred_check_branch
        %1241 = sbr.rel (%p1239) target = $region68
      $region67: #{tpu_custom_call.1} parent=5 // pred_region
        %s1242 = ssub.s32 %s16, 2
      $region68: #{tpu_custom_call.1} parent=5 // pred_fallthru
        _
    $region6: #{tpu_custom_call.1} parent=1 // loop_footer
      %s20 = sadd.s32 1, %s16
    $region7: #{tpu_custom_call.1} parent=1 // loop_footer_branch
      %15 = sbr.rel target = $region3
    $region8: #{tpu_custom_call.1} parent=1 // loop_exit
      _
    %1243 = vsyncpa [#allocation6], 1
    %s1244 = scalar_lea.sflag [#allocation6], 1
    %1245 = vsyncpa %s1244, 1
    %1246 = vsyncpa [#allocation10], 1
    %1247 = vsyncpa [#allocation7], 1
    %s1248 = scalar_lea.sflag [#allocation7], 1
    %1249 = vsyncpa %s1248, 1
    %1250 = vsyncpa [#allocation8], 1
    %s1251 = scalar_lea.sflag [#allocation8], 1
    %1252 = vsyncpa %s1251, 1

</llo_original>
